<compile_context>
chip_gen: v5e
topology: v5e:2x2
jax: 0.10.0
libtpu: 0.0.40
codegen_flags: <defaults>
</compile_context>

<pallas_src>
import functools

import numpy as np
import jax
import jax.numpy as jnp
from jax import lax
from jax.experimental import pallas as pl
from jax.experimental.pallas import tpu as pltpu


def _round_up(x, m):
    return (x + m - 1) // m * m


def _cdiv(a, b):
    return -(-a // b)


def _vmem_limit_bytes():
    """Scoped-VMEM limit: physical capacity minus headroom (v7x has only 64 MiB/TC)."""
    cap = 0
    try:
        cap = int(getattr(pltpu.get_tpu_info(), "vmem_capacity_bytes", 0) or 0)
    except Exception:
        cap = 0
    if cap <= 0:
        cap = 64 * 1024 * 1024          # conservative default = v7x per-TensorCore VMEM
    return min(max(cap - 8 * 1024 * 1024, 32 * 1024 * 1024), 128 * 1024 * 1024)


def _pick_tq(q_total, s2cp, cp, halo, kk2, budget, max_tq=4096):
    """Largest flattened-spatial tile fitting the VMEM budget (multiple of 16)."""
    q_cap = _round_up(max(q_total, 16), 16)
    max_tq = min(max_tq, q_cap)
    fixed = (2 * (q_cap + max_tq) * cp * 2      # resident bf16 output (double-buffered over batch)
             + 2 * kk2 * s2cp * cp * 2          # bf16 weights (double-buffered)
             + 2 * 2 * halo * s2cp              # strip halo (double-buffered, bf16)
             + 8 * cp * 4)                      # gamma/beta + stats scratch
    per_row = 2 * 2 * s2cp + 16 * cp            # strip rows (x2 buf, bf16) + ~4 f32 temporaries
    avail = budget - fixed
    if avail <= 16 * per_row:
        # TODO(synk): for very large images the resident output itself may not fit;
        # fall back to a two-pass (conv -> norm) kernel split in that case.
        tq = 16
    else:
        tq = min(avail // per_row, max_tq)
    tq = max(16, (int(tq) // 16) * 16)
    tq = min(tq, q_cap)
    # Balance the tiles so the Q padding stays minimal.
    n_t = _cdiv(q_total, tq)
    tq = min(_round_up(_cdiv(q_total, n_t), 16), q_cap)
    return tq


def _downsample_kernel(x_ref, w_ref, g_ref, b_ref, o_ref, ssum_ref, ssq_ref, *,
                       tq, q_valid, w_half, w_out, offsets, n_valid, eps, slope):
    # x_ref : (1, STRIP, S2Cp) bf16  flattened space-to-depth input strip (with halo)
    # w_ref : (KK2, S2Cp, Cp)  bf16  per-tap conv weights
    # g_ref : (1, Cp)          f32   InstanceNorm gamma (zero padded)
    # b_ref : (1, Cp)          f32   InstanceNorm beta  (zero padded)
    # o_ref : (1, Q_pad, Cp)   bf16  output block, resident in VMEM across the tile axis
    # ssum/ssq : (1, Cp)       f32   streaming per-channel statistics
    t = pl.program_id(1)
    n_t = pl.num_programs(1)

    @pl.when(t == 0)
    def _():
        ssum_ref[...] = jnp.zeros_like(ssum_ref)
        ssq_ref[...] = jnp.zeros_like(ssq_ref)

    # Conv tile = (K/s)^2 accumulating bf16 MXU matmuls over tap-shifted strip views.
    y = None
    for i, off in enumerate(offsets):
        part = jnp.dot(x_ref[0, off:off + tq, :], w_ref[i],
                       preferred_element_type=jnp.float32)        # (TQ, Cp) f32
        y = part if y is None else y + part

    # Streaming InstanceNorm statistics (exclude the junk column and Q-padding rows).
    q0 = t * tq
    qidx = q0 + lax.broadcasted_iota(jnp.int32, (tq, 1), 0)
    valid = jnp.logical_and(qidx % w_half < w_out, qidx < q_valid)
    mask = valid.astype(jnp.float32)                              # (TQ, 1)
    yv = y * mask
    ssum_ref[...] += jnp.sum(yv, axis=0, keepdims=True)
    ssq_ref[...] += jnp.sum(yv * yv, axis=0, keepdims=True)

    row0 = pl.multiple_of(q0, tq)
    o_ref[0, pl.ds(row0, tq), :] = y.astype(o_ref.dtype)

    # Finalize on the last tile: InstanceNorm2d (biased var, eps) folded into one FMA
    # per element + LeakyReLU, streamed in TQ-row chunks over the resident bf16 output.
    @pl.when(t == n_t - 1)
    def _():
        inv_n = 1.0 / float(n_valid)
        mean = ssum_ref[...] * inv_n                              # (1, Cp)
        var = jnp.maximum(ssq_ref[...] * inv_n - mean * mean, 0.0)
        scale = g_ref[...] * lax.rsqrt(var + eps)
        shift = b_ref[...] - mean * scale

        def body(i, carry):
            r0 = pl.multiple_of(i * tq, tq)
            z = o_ref[0, pl.ds(r0, tq), :].astype(jnp.float32) * scale + shift
            o_ref[0, pl.ds(r0, tq), :] = jnp.where(z > 0, z, slope * z).astype(o_ref.dtype)
            return carry

        lax.fori_loop(0, n_t, body, 0)


def downsampling_forward(x, conv_w, gamma, beta, *, kernel_size=4, stride=2,
                         padding=1, channels_last_out=False, out_dtype=None,
                         max_tq=4096, eps=1e-5, negative_slope=0.2):
    """Fused Conv2d(k,s,p,bias=False) + InstanceNorm2d(affine) + LeakyReLU(0.2).

    x: (B, C_in, H, W) NCHW. conv_w: (C_out, C_in, K, K). gamma/beta: (C_out,).
    Returns NCHW by default (NHWC if channels_last_out=True); bf16 unless out_dtype.
    Requires K % stride == 0 and (H + 2*padding) % stride == 0 (true for the
    CycleGAN Downsampling defaults k=4, s=2, p=1 with even H, W).
    """
    B, C_in, H, W = x.shape
    C_out = conv_w.shape[0]
    K, s, p = kernel_size, stride, padding
    assert K % s == 0, "space-to-depth lowering needs kernel_size % stride == 0"
    assert (H + 2 * p) % s == 0 and (W + 2 * p) % s == 0
    H_out = (H + 2 * p - K) // s + 1
    W_out = (W + 2 * p - K) // s + 1
    assert H_out >= 1 and W_out >= 1

    Kt = K // s                        # taps per spatial dim after space-to-depth
    KK2 = Kt * Kt
    H_half = (H + 2 * p) // s          # = H_out + Kt - 1
    W_half = (W + 2 * p) // s          # = W_out + Kt - 1
    S2C = s * s * C_in
    S2Cp = _round_up(S2C, 16)          # bf16-friendly contraction dim (kept small: HBM bound)
    Cp = _round_up(C_out, 128)         # lane-dense output stores
    N = H_half * W_half
    Q_total = H_out * W_half           # flattened output rows (incl. Kt-1 junk columns)
    n_valid = H_out * W_out
    HALO = (Kt - 1) * (W_half + 1)     # extra flat rows a tile needs beyond its own TQ

    vmem_limit = _vmem_limit_bytes()
    TQ = _pick_tq(Q_total, S2Cp, Cp, HALO, KK2,
                  budget=int(vmem_limit * 0.75), max_tq=max_tq)
    n_t = _cdiv(Q_total, TQ)
    Q_pad = n_t * TQ
    STRIP = _round_up(TQ + HALO, 8)
    N_pad = (n_t - 1) * TQ + STRIP

    # ---- host-side glue (one cheap pass): NHWC + pad + space-to-depth + halo strips.
    # TODO(synk): fold the strip/halo construction into the kernel with a manual halo
    # DMA (memory_space=pl.ANY) to drop the remaining extra input pass entirely.
    x_pad = jnp.pad(jnp.transpose(x, (0, 2, 3, 1)),
                    ((0, 0), (p, p), (p, p), (0, 0)))
    xs = x_pad.reshape(B, H_half, s, W_half, s, C_in)
    xs = xs.transpose(0, 1, 3, 2, 4, 5).reshape(B, N, S2C).astype(jnp.bfloat16)
    xs = jnp.pad(xs, ((0, 0), (0, N_pad - N), (0, S2Cp - S2C)))
    if n_t == 1:
        xs_strips = xs
    else:
        idx = (np.arange(n_t, dtype=np.int32)[:, None] * TQ
               + np.arange(STRIP, dtype=np.int32)[None, :]).reshape(-1)
        xs_strips = jnp.take(xs, jnp.asarray(idx), axis=1)
    xs_strips = xs_strips.reshape(B * n_t, STRIP, S2Cp)

    # Per-tap weights matching the (a, c, cin) space-to-depth channel ordering.
    wt = jnp.transpose(conv_w, (2, 3, 1, 0))                      # (K, K, C_in, C_out)
    taps, offsets = [], []
    for dh in range(Kt):
        for dw in range(Kt):
            taps.append(wt[dh * s:(dh + 1) * s, dw * s:(dw + 1) * s].reshape(S2C, C_out))
            offsets.append(dh * W_half + dw)
    w_all = jnp.stack(taps, axis=0)
    w_all = jnp.pad(w_all, ((0, 0), (0, S2Cp - S2C), (0, Cp - C_out))).astype(jnp.bfloat16)

    g2 = jnp.pad(gamma.reshape(1, C_out).astype(jnp.float32), ((0, 0), (0, Cp - C_out)))
    b2 = jnp.pad(beta.reshape(1, C_out).astype(jnp.float32), ((0, 0), (0, Cp - C_out)))

    kernel = functools.partial(
        _downsample_kernel, tq=TQ, q_valid=Q_total, w_half=W_half, w_out=W_out,
        offsets=tuple(offsets), n_valid=n_valid, eps=eps, slope=negative_slope)

    flops = 2 * B * n_valid * (C_in * K * K) * C_out
    bytes_accessed = int(xs_strips.size * 2 + w_all.size * 2
                         + B * Q_pad * Cp * 2 + 2 * Cp * 4)

    # TODO(synk): when B == 1 on v7x, additionally split the tile axis across the two
    # TensorCores (CMEM partial-stats combine) to avoid leaving one core idle.
    out = pl.pallas_call(
        kernel,
        out_shape=jax.ShapeDtypeStruct((B, Q_pad, Cp), jnp.bfloat16),
        grid_spec=pltpu.PrefetchScalarGridSpec(
            num_scalar_prefetch=0,
            grid=(B, n_t),
            in_specs=[
                pl.BlockSpec((1, STRIP, S2Cp), lambda b, t, n=n_t: (b * n + t, 0, 0)),
                pl.BlockSpec((KK2, S2Cp, Cp), lambda b, t: (0, 0, 0)),
                pl.BlockSpec((1, Cp), lambda b, t: (0, 0)),
                pl.BlockSpec((1, Cp), lambda b, t: (0, 0)),
            ],
            out_specs=pl.BlockSpec((1, Q_pad, Cp), lambda b, t: (b, 0, 0)),
            scratch_shapes=[pltpu.VMEM((1, Cp), jnp.float32),
                            pltpu.VMEM((1, Cp), jnp.float32)],
        ),
        compiler_params=pltpu.CompilerParams(
            dimension_semantics=("parallel", "arbitrary"),
            vmem_limit_bytes=int(vmem_limit),
        ),
        cost_estimate=pl.CostEstimate(flops=int(flops), transcendentals=0,
                                      bytes_accessed=bytes_accessed),
    )(xs_strips, w_all, g2, b2)

    out = out[:, :Q_total, :]
    if Cp != C_out:
        out = out[:, :, :C_out]
    out = out.reshape(B, H_out, W_half, C_out)[:, :, :W_out, :]    # NHWC, junk column dropped
    if out_dtype is not None and out.dtype != out_dtype:
        out = out.astype(out_dtype)
    if channels_last_out:
        return out
    # For chained Pallas layers prefer channels_last_out=True (skips this HBM pass).
    return jnp.transpose(out, (0, 3, 1, 2))                        # NCHW (PyTorch parity)


def _reference(x, conv_w, gamma, beta, *, stride=2, padding=1):
    """Pure-JAX f32 reference: Conv2d(no bias) + InstanceNorm2d(affine) + LeakyReLU(0.2)."""
    y = lax.conv_general_dilated(
        x, conv_w, window_strides=(stride, stride),
        padding=((padding, padding), (padding, padding)),
        dimension_numbers=("NCHW", "OIHW", "NCHW"))
    mean = y.mean(axis=(2, 3), keepdims=True)
    var = ((y - mean) ** 2).mean(axis=(2, 3), keepdims=True)
    yn = (y - mean) * lax.rsqrt(var + 1e-5)
    ya = yn * gamma.reshape(1, -1, 1, 1) + beta.reshape(1, -1, 1, 1)
    return jnp.where(ya > 0, ya, 0.2 * ya)


if __name__ == "__main__":
    B, C_in, H, W = 2, 4, 16, 16
    C_out, K = 8, 4

    key = jax.random.PRNGKey(0)
    kx, kwt, kg, kb = jax.random.split(key, 4)

    x = jax.random.normal(kx, (B, C_in, H, W), dtype=jnp.float32)
    conv_w = jax.random.normal(kwt, (C_out, C_in, K, K), dtype=jnp.float32) * 0.1
    gamma = 1.0 + 0.1 * jax.random.normal(kg, (C_out,), dtype=jnp.float32)
    beta = 0.1 * jax.random.normal(kb, (C_out,), dtype=jnp.float32)

    y = downsampling_forward(x, conv_w, gamma, beta)
    jax.block_until_ready(y)
    assert y.shape == (B, C_out, H // 2, W // 2), y.shape

    ref = _reference(x, conv_w, gamma, beta)
    err = float(jnp.max(jnp.abs(y.astype(jnp.float32) - ref)))
    assert err < 0.1, f"max abs err too large: {err}"   # bf16 MXU inputs + bf16 output
    print("KERNEL_OK")
</pallas_src>

<mosaic_0001>
module attributes {stable_mosaic.version = 11 : i64} {
  func.func @_downsample_kernel(%arg0: i32, %arg1: i32, %arg2: memref<1x96x16xbf16, #tpu.memory_space<vmem>>, %arg3: memref<4x16x128xbf16, #tpu.memory_space<vmem>>, %arg4: memref<1x128xf32, #tpu.memory_space<vmem>>, %arg5: memref<1x128xf32, #tpu.memory_space<vmem>>, %arg6: memref<1x80x128xbf16, #tpu.memory_space<vmem>>, %arg7: memref<1x128xf32, #tpu.memory_space<vmem>>, %arg8: memref<1x128xf32, #tpu.memory_space<vmem>>) attributes {dimension_semantics = [#tpu.dimension_semantics<parallel>, #tpu.dimension_semantics<arbitrary>], iteration_bounds = array<i64: 2, 1>, scalar_prefetch = 0 : i64, scratch_operands = 2 : i64, tpu.core_type = #tpu.core_type<tc>, window_params = [{transform_indices = @transform_0, window_bounds = array<i64: 1, 96, 16>}, {pipeline_mode = #tpu.pipeline_mode<synchronous>, transform_indices = @transform_1, window_bounds = array<i64: 4, 16, 128>}, {pipeline_mode = #tpu.pipeline_mode<synchronous>, transform_indices = @transform_2, window_bounds = array<i64: 1, 128>}, {pipeline_mode = #tpu.pipeline_mode<synchronous>, transform_indices = @transform_3, window_bounds = array<i64: 1, 128>}, {transform_indices = @transform_4, window_bounds = array<i64: 1, 80, 128>}]} {
    %c0_i32 = arith.constant 0 : i32
    %0 = arith.cmpi eq, %arg1, %c0_i32 : i32
    %1 = arith.extui %0 : i1 to i32
    %c0_i32_0 = arith.constant 0 : i32
    %2 = arith.cmpi ne, %1, %c0_i32_0 : i32
    scf.if %2 {
      %cst_40 = arith.constant 0.000000e+00 : f32
      %75 = vector.broadcast %cst_40 : f32 to vector<1x128xf32>
      %c0_41 = arith.constant 0 : index
      %c0_42 = arith.constant 0 : index
      %76 = vector.load %arg7[%c0_41, %c0_42] : memref<1x128xf32, #tpu.memory_space<vmem>>, vector<1x128xf32>
      tpu.vector_store %arg7[%c0_41, %c0_42], %75 {strides = array<i32>} : memref<1x128xf32, #tpu.memory_space<vmem>>, vector<1x128xf32>,
      %cst_43 = arith.constant 0.000000e+00 : f32
      %77 = vector.broadcast %cst_43 : f32 to vector<1x128xf32>
      %c0_44 = arith.constant 0 : index
      %c0_45 = arith.constant 0 : index
      %78 = vector.load %arg8[%c0_44, %c0_45] : memref<1x128xf32, #tpu.memory_space<vmem>>, vector<1x128xf32>
      tpu.vector_store %arg8[%c0_44, %c0_45], %77 {strides = array<i32>} : memref<1x128xf32, #tpu.memory_space<vmem>>, vector<1x128xf32>,
    } else {
    }
    %c0 = arith.constant 0 : index
    %c0_1 = arith.constant 0 : index
    %c0_2 = arith.constant 0 : index
    %3 = vector.load %arg2[%c0, %c0_1, %c0_2] : memref<1x96x16xbf16, #tpu.memory_space<vmem>>, vector<1x80x16xbf16>
    %4 = vector.shape_cast %3 : vector<1x80x16xbf16> to vector<80x16xbf16>
    %c0_3 = arith.constant 0 : index
    %c0_4 = arith.constant 0 : index
    %c0_5 = arith.constant 0 : index
    %5 = vector.load %arg3[%c0_3, %c0_4, %c0_5] : memref<4x16x128xbf16, #tpu.memory_space<vmem>>, vector<1x16x128xbf16>
    %6 = vector.shape_cast %5 : vector<1x16x128xbf16> to vector<16x128xbf16>
    %cst = arith.constant dense<0.000000e+00> : vector<80x128xf32>
    %7 = tpu.matmul %4, %6, %cst {dimension_numbers = #tpu.dot_dimension_numbers<[1], [0], [0], [1], [0, 0, 1, 1], [], []>} : vector<80x16xbf16>, vector<16x128xbf16>, vector<80x128xf32> -> vector<80x128xf32>
    %c0_6 = arith.constant 0 : index
    %c1 = arith.constant 1 : index
    %c0_7 = arith.constant 0 : index
    %8 = vector.load %arg2[%c0_6, %c1, %c0_7] : memref<1x96x16xbf16, #tpu.memory_space<vmem>>, vector<1x80x16xbf16>
    %9 = vector.shape_cast %8 : vector<1x80x16xbf16> to vector<80x16xbf16>
    %c1_8 = arith.constant 1 : index
    %c0_9 = arith.constant 0 : index
    %c0_10 = arith.constant 0 : index
    %10 = vector.load %arg3[%c1_8, %c0_9, %c0_10] : memref<4x16x128xbf16, #tpu.memory_space<vmem>>, vector<1x16x128xbf16>
    %11 = vector.shape_cast %10 : vector<1x16x128xbf16> to vector<16x128xbf16>
    %cst_11 = arith.constant dense<0.000000e+00> : vector<80x128xf32>
    %12 = tpu.matmul %9, %11, %cst_11 {dimension_numbers = #tpu.dot_dimension_numbers<[1], [0], [0], [1], [0, 0, 1, 1], [], []>} : vector<80x16xbf16>, vector<16x128xbf16>, vector<80x128xf32> -> vector<80x128xf32>
    %13 = arith.addf %7, %12 : vector<80x128xf32>
    %c0_12 = arith.constant 0 : index
    %c9 = arith.constant 9 : index
    %c0_13 = arith.constant 0 : index
    %14 = vector.load %arg2[%c0_12, %c9, %c0_13] : memref<1x96x16xbf16, #tpu.memory_space<vmem>>, vector<1x80x16xbf16>
    %15 = vector.shape_cast %14 : vector<1x80x16xbf16> to vector<80x16xbf16>
    %c2 = arith.constant 2 : index
    %c0_14 = arith.constant 0 : index
    %c0_15 = arith.constant 0 : index
    %16 = vector.load %arg3[%c2, %c0_14, %c0_15] : memref<4x16x128xbf16, #tpu.memory_space<vmem>>, vector<1x16x128xbf16>
    %17 = vector.shape_cast %16 : vector<1x16x128xbf16> to vector<16x128xbf16>
    %cst_16 = arith.constant dense<0.000000e+00> : vector<80x128xf32>
    %18 = tpu.matmul %15, %17, %cst_16 {dimension_numbers = #tpu.dot_dimension_numbers<[1], [0], [0], [1], [0, 0, 1, 1], [], []>} : vector<80x16xbf16>, vector<16x128xbf16>, vector<80x128xf32> -> vector<80x128xf32>
    %19 = arith.addf %13, %18 : vector<80x128xf32>
    %c0_17 = arith.constant 0 : index
    %c10 = arith.constant 10 : index
    %c0_18 = arith.constant 0 : index
    %20 = vector.load %arg2[%c0_17, %c10, %c0_18] : memref<1x96x16xbf16, #tpu.memory_space<vmem>>, vector<1x80x16xbf16>
    %21 = vector.shape_cast %20 : vector<1x80x16xbf16> to vector<80x16xbf16>
    %c3 = arith.constant 3 : index
    %c0_19 = arith.constant 0 : index
    %c0_20 = arith.constant 0 : index
    %22 = vector.load %arg3[%c3, %c0_19, %c0_20] : memref<4x16x128xbf16, #tpu.memory_space<vmem>>, vector<1x16x128xbf16>
    %23 = vector.shape_cast %22 : vector<1x16x128xbf16> to vector<16x128xbf16>
    %cst_21 = arith.constant dense<0.000000e+00> : vector<80x128xf32>
    %24 = tpu.matmul %21, %23, %cst_21 {dimension_numbers = #tpu.dot_dimension_numbers<[1], [0], [0], [1], [0, 0, 1, 1], [], []>} : vector<80x16xbf16>, vector<16x128xbf16>, vector<80x128xf32> -> vector<80x128xf32>
    %25 = arith.addf %19, %24 : vector<80x128xf32>
    %c80_i32 = arith.constant 80 : i32
    %26 = arith.muli %arg1, %c80_i32 : i32
    %27 = tpu.iota {dimensions = array<i32: 0>} : vector<80x1xi32>
    %28 = vector.broadcast %26 : i32 to vector<80x1xi32>
    %29 = arith.addi %28, %27 : vector<80x1xi32>
    %c9_i32 = arith.constant 9 : i32
    %c0_i32_22 = arith.constant 0 : i32
    %30 = arith.cmpi eq, %c9_i32, %c0_i32_22 : i32
    %c1_i32 = arith.constant 1 : i32
    %31 = arith.select %30, %c1_i32, %c9_i32 : i32
    %32 = vector.broadcast %31 : i32 to vector<80x1xi32>
    %33 = arith.remsi %29, %32 : vector<80x1xi32>
    %c0_i32_23 = arith.constant 0 : i32
    %34 = vector.broadcast %c0_i32_23 : i32 to vector<80x1xi32>
    %35 = arith.cmpi ne, %33, %34 : vector<80x1xi32>
    %c0_i32_24 = arith.constant 0 : i32
    %36 = vector.broadcast %c0_i32_24 : i32 to vector<80x1xi32>
    %37 = arith.cmpi slt, %33, %36 : vector<80x1xi32>
    %c0_i32_25 = arith.constant 0 : i32
    %38 = arith.cmpi slt, %31, %c0_i32_25 : i32
    %39 = vector.broadcast %38 : i1 to vector<80x1xi1>
    %40 = vector.broadcast %39 : vector<80x1xi1> to vector<80x1xi1>
    %41 = arith.xori %37, %40 : vector<80x1xi1>
    %42 = arith.andi %41, %35 : vector<80x1xi1>
    %43 = vector.broadcast %31 : i32 to vector<80x1xi32>
    %44 = arith.addi %33, %43 : vector<80x1xi32>
    %45 = arith.select %42, %44, %33 : vector<80x1xi1>, vector<80x1xi32>
    %c8_i32 = arith.constant 8 : i32
    %46 = vector.broadcast %c8_i32 : i32 to vector<80x1xi32>
    %47 = arith.cmpi slt, %45, %46 : vector<80x1xi32>
    %c72_i32 = arith.constant 72 : i32
    %48 = vector.broadcast %c72_i32 : i32 to vector<80x1xi32>
    %49 = arith.cmpi slt, %29, %48 : vector<80x1xi32>
    %50 = arith.andi %47, %49 : vector<80x1xi1>
    %51 = arith.extui %50 : vector<80x1xi1> to vector<80x1xi32>
    %52 = arith.sitofp %51 : vector<80x1xi32> to vector<80x1xf32>
    %53 = vector.broadcast %52 : vector<80x1xf32> to vector<80x128xf32>
    %54 = arith.mulf %25, %53 : vector<80x128xf32>
    %c0_26 = arith.constant 0 : index
    %c0_27 = arith.constant 0 : index
    %55 = vector.load %arg7[%c0_26, %c0_27] : memref<1x128xf32, #tpu.memory_space<vmem>>, vector<1x128xf32>
    %cst_28 = arith.constant dense<0.000000e+00> : vector<128xf32>
    %56 = vector.multi_reduction <add>, %54, %cst_28 [0] : vector<80x128xf32> to vector<128xf32>
    %57 = vector.shape_cast %56 : vector<128xf32> to vector<1x128xf32>
    %58 = arith.addf %55, %57 : vector<1x128xf32>
    %c0_29 = arith.constant 0 : index
    %c0_30 = arith.constant 0 : index
    %59 = vector.load %arg7[%c0_29, %c0_30] : memref<1x128xf32, #tpu.memory_space<vmem>>, vector<1x128xf32>
    tpu.vector_store %arg7[%c0_29, %c0_30], %58 {strides = array<i32>} : memref<1x128xf32, #tpu.memory_space<vmem>>, vector<1x128xf32>,
    %c0_31 = arith.constant 0 : index
    %c0_32 = arith.constant 0 : index
    %60 = vector.load %arg8[%c0_31, %c0_32] : memref<1x128xf32, #tpu.memory_space<vmem>>, vector<1x128xf32>
    %61 = arith.mulf %54, %54 : vector<80x128xf32>
    %cst_33 = arith.constant dense<0.000000e+00> : vector<128xf32>
    %62 = vector.multi_reduction <add>, %61, %cst_33 [0] : vector<80x128xf32> to vector<128xf32>
    %63 = vector.shape_cast %62 : vector<128xf32> to vector<1x128xf32>
    %64 = arith.addf %60, %63 : vector<1x128xf32>
    %c0_34 = arith.constant 0 : index
    %c0_35 = arith.constant 0 : index
    %65 = vector.load %arg8[%c0_34, %c0_35] : memref<1x128xf32, #tpu.memory_space<vmem>>, vector<1x128xf32>
    tpu.vector_store %arg8[%c0_34, %c0_35], %64 {strides = array<i32>} : memref<1x128xf32, #tpu.memory_space<vmem>>, vector<1x128xf32>,
    %66 = tpu.assume_multiple %26, 80 : i32
    %67 = arith.truncf %25 : vector<80x128xf32> to vector<80x128xbf16>
    %c0_36 = arith.constant 0 : index
    %68 = arith.index_cast %66 : i32 to index
    %c0_37 = arith.constant 0 : index
    %69 = vector.load %arg6[%c0_36, %68, %c0_37] : memref<1x80x128xbf16, #tpu.memory_space<vmem>>, vector<1x80x128xbf16>
    %70 = vector.shape_cast %69 : vector<1x80x128xbf16> to vector<80x128xbf16>
    %71 = vector.shape_cast %67 : vector<80x128xbf16> to vector<1x80x128xbf16>
    tpu.vector_store %arg6[%c0_36, %68, %c0_37], %71 {strides = array<i32>} : memref<1x80x128xbf16, #tpu.memory_space<vmem>>, vector<1x80x128xbf16>,
    %c0_i32_38 = arith.constant 0 : i32
    %72 = arith.cmpi eq, %arg1, %c0_i32_38 : i32
    %73 = arith.extui %72 : i1 to i32
    %c0_i32_39 = arith.constant 0 : i32
    %74 = arith.cmpi ne, %73, %c0_i32_39 : i32
    scf.if %74 {
      %c0_40 = arith.constant 0 : index
      %c0_41 = arith.constant 0 : index
      %75 = vector.load %arg7[%c0_40, %c0_41] : memref<1x128xf32, #tpu.memory_space<vmem>>, vector<1x128xf32>
      %cst_42 = arith.constant 1.562500e-02 : f32
      %76 = vector.broadcast %cst_42 : f32 to vector<1x128xf32>
      %77 = arith.mulf %75, %76 : vector<1x128xf32>
      %c0_43 = arith.constant 0 : index
      %c0_44 = arith.constant 0 : index
      %78 = vector.load %arg8[%c0_43, %c0_44] : memref<1x128xf32, #tpu.memory_space<vmem>>, vector<1x128xf32>
      %cst_45 = arith.constant 1.562500e-02 : f32
      %79 = vector.broadcast %cst_45 : f32 to vector<1x128xf32>
      %80 = arith.mulf %78, %79 : vector<1x128xf32>
      %81 = arith.mulf %77, %77 : vector<1x128xf32>
      %82 = arith.subf %80, %81 : vector<1x128xf32>
      %cst_46 = arith.constant 0.000000e+00 : f32
      %83 = vector.broadcast %cst_46 : f32 to vector<1x128xf32>
      %84 = arith.maximumf %82, %83 : vector<1x128xf32>
      %c0_47 = arith.constant 0 : index
      %c0_48 = arith.constant 0 : index
      %85 = vector.load %arg4[%c0_47, %c0_48] : memref<1x128xf32, #tpu.memory_space<vmem>>, vector<1x128xf32>
      %cst_49 = arith.constant 9.99999974E-6 : f32
      %86 = vector.broadcast %cst_49 : f32 to vector<1x128xf32>
      %87 = arith.addf %84, %86 : vector<1x128xf32>
      %88 = math.rsqrt %87 : vector<1x128xf32>
      %89 = arith.mulf %85, %88 : vector<1x128xf32>
      %c0_50 = arith.constant 0 : index
      %c0_51 = arith.constant 0 : index
      %90 = vector.load %arg5[%c0_50, %c0_51] : memref<1x128xf32, #tpu.memory_space<vmem>>, vector<1x128xf32>
      %91 = arith.mulf %77, %89 : vector<1x128xf32>
      %92 = arith.subf %90, %91 : vector<1x128xf32>
      %c0_i32_52 = arith.constant 0 : i32
      %c80_i32_53 = arith.constant 80 : i32
      %93 = arith.muli %c0_i32_52, %c80_i32_53 : i32
      %94 = tpu.assume_multiple %93, 80 : i32
      %c0_54 = arith.constant 0 : index
      %95 = arith.index_cast %94 : i32 to index
      %c0_55 = arith.constant 0 : index
      %96 = vector.load %arg6[%c0_54, %95, %c0_55] : memref<1x80x128xbf16, #tpu.memory_space<vmem>>, vector<1x80x128xbf16>
      %97 = vector.shape_cast %96 : vector<1x80x128xbf16> to vector<80x128xbf16>
      %98 = arith.extf %97 : vector<80x128xbf16> to vector<80x128xf32>
      %99 = vector.broadcast %89 : vector<1x128xf32> to vector<80x128xf32>
      %100 = arith.mulf %98, %99 : vector<80x128xf32>
      %101 = vector.broadcast %92 : vector<1x128xf32> to vector<80x128xf32>
      %102 = arith.addf %100, %101 : vector<80x128xf32>
      %cst_56 = arith.constant 0.000000e+00 : f32
      %103 = vector.broadcast %cst_56 : f32 to vector<80x128xf32>
      %104 = arith.cmpf ogt, %102, %103 : vector<80x128xf32>
      %cst_57 = arith.constant 2.000000e-01 : f32
      %105 = vector.broadcast %cst_57 : f32 to vector<80x128xf32>
      %106 = arith.mulf %105, %102 : vector<80x128xf32>
      %107 = arith.select %104, %102, %106 : vector<80x128xi1>, vector<80x128xf32>
      %108 = arith.truncf %107 : vector<80x128xf32> to vector<80x128xbf16>
      %c0_58 = arith.constant 0 : index
      %109 = arith.index_cast %94 : i32 to index
      %c0_59 = arith.constant 0 : index
      %110 = vector.load %arg6[%c0_58, %109, %c0_59] : memref<1x80x128xbf16, #tpu.memory_space<vmem>>, vector<1x80x128xbf16>
      %111 = vector.shape_cast %110 : vector<1x80x128xbf16> to vector<80x128xbf16>
      %112 = vector.shape_cast %108 : vector<80x128xbf16> to vector<1x80x128xbf16>
      tpu.vector_store %arg6[%c0_58, %109, %c0_59], %112 {strides = array<i32>} : memref<1x80x128xbf16, #tpu.memory_space<vmem>>, vector<1x80x128xbf16>,
      %c1_i32_60 = arith.constant 1 : i32
    } else {
    }
    return
  }
  func.func @transform_0(%arg0: i32, %arg1: i32) -> (i32, i32, i32) {
    %c1_i32 = arith.constant 1 : i32
    %0 = arith.muli %arg0, %c1_i32 : i32
    %1 = arith.addi %0, %arg1 : i32
    %c0_i32 = arith.constant 0 : i32
    %c0_i32_0 = arith.constant 0 : i32
    %c0_i32_1 = arith.constant 0 : i32
    return %1, %c0_i32, %c0_i32_0 : i32, i32, i32
  }
  func.func @transform_1(%arg0: i32, %arg1: i32) -> (i32, i32, i32) {
    %c0_i32 = arith.constant 0 : i32
    %c0_i32_0 = arith.constant 0 : i32
    %c0_i32_1 = arith.constant 0 : i32
    %c0_i32_2 = arith.constant 0 : i32
    return %c0_i32, %c0_i32_0, %c0_i32_1 : i32, i32, i32
  }
  func.func @transform_2(%arg0: i32, %arg1: i32) -> (i32, i32) {
    %c0_i32 = arith.constant 0 : i32
    %c0_i32_0 = arith.constant 0 : i32
    %c0_i32_1 = arith.constant 0 : i32
    return %c0_i32, %c0_i32_0 : i32, i32
  }
  func.func @transform_3(%arg0: i32, %arg1: i32) -> (i32, i32) {
    %c0_i32 = arith.constant 0 : i32
    %c0_i32_0 = arith.constant 0 : i32
    %c0_i32_1 = arith.constant 0 : i32
    return %c0_i32, %c0_i32_0 : i32, i32
  }
  func.func @transform_4(%arg0: i32, %arg1: i32) -> (i32, i32, i32) {
    %c0_i32 = arith.constant 0 : i32
    %c0_i32_0 = arith.constant 0 : i32
    %c0_i32_1 = arith.constant 0 : i32
    return %arg0, %c0_i32, %c0_i32_0 : i32, i32, i32
  }
}

</mosaic_0001>

<llo_original>
// kernel: tpu_custom_call.1
$region0: #{tpu_custom_call.1}
  #allocation0 [shape = 'u32[]', space=smem, size = 0x4, offset = 0x4, fixed_abs, tag = 'smem constant byte address 0x4 - core index']
  #allocation1 [shape = 'u32[72,128]{1,0:T(1,128)}', space=vmem, size = 0x9000, scoped, tag = 'internal scratch']
  #allocation2 [shape = 'f32[1,128]{1,0:T(1,128)}', space=vmem, size = 0x200, scoped, tag = 'scratch operand']
  #allocation3 [shape = 'f32[1,128]{1,0:T(1,128)}', space=vmem, size = 0x200, scoped, tag = 'scratch operand']
  %s0 = inlined_call_operand.vmem [shape: bf16[2,96,16], index: 0, kind: input, shape index: {}]
  %s1 = inlined_call_operand.vmem [shape: bf16[4,16,128], index: 1, kind: input, shape index: {}]
  %s2 = inlined_call_operand.vmem [shape: f32[1,128], index: 2, kind: input, shape index: {}]
  %s3 = inlined_call_operand.vmem [shape: f32[1,128], index: 3, kind: input, shape index: {}]
  %s4 = inlined_call_operand.hbm [shape: bf16[2,80,128], index: 4, kind: output, shape index: {}]
  %s5 = sld [smem:[#allocation0]]
  $region57: #{tpu_custom_call.1} parent=0
    _
  %s7 = ssub.s32 1, %s5
  %s8 = scalar_select 0, %s7, %s5
  $region1: #{tpu_custom_call.1} parent=0
    #allocation4 [shape = 'u8[40960]{0}', space=vmem, size = 0xa000, scoped, tag = 'output window, operand 0']
    #allocation5 [shape = 's32[2]{0}', space=sflag, size = 0x8, scoped, tag = 'scoped memory for tpu_custom_call.1']
    %9 = vsyncpa [#allocation5], 0
    %s10 = scalar_lea.sflag [#allocation5], 1
    %11 = vsyncpa %s10, 0
    loop: start=0, step=1, limit=4
    $region2: #{tpu_custom_call.1} parent=1 // loop_pre_header
      _
    $region3: #{tpu_custom_call.1} parent=1 // loop_header
      %s13 = sphi 0, %s17
      %p14 = scmp.ge.s32.totalorder %s13, 4
      %s20 = sphi 0, %s32
      %s21 = sphi 0, %s28
      %s22 = sphi 0, %s20
      %s23 = sphi 0, %s21
      %s24 = sphi 0, %s22
      %s25 = sphi 0, %s23
      %s37 = sphi 0, %s39
      %s40 = sphi 0, %s37
      %s41 = sphi 0, %s40
      %s57 = sphi 0, %s41
      %s61 = sphi 0, %s61
      %s63 = sphi 0, %s61
      %s64 = sphi 0, %s63
      %s78 = sphi 0, %s64
      %s82 = sphi 0, %s82
      %s84 = sphi 0, %s82
      %s85 = sphi 0, %s84
      %s99 = sphi 0, %s85
      %s103 = sphi 0, %s103
      %s105 = sphi 0, %s103
      %s106 = sphi 0, %s105
      %s120 = sphi 0, %s106
      %s126 = sphi 0, %s128
      %s129 = sphi 0, %s126
      %s130 = sphi 0, %s129
      %s146 = sphi 0, %s130
    $region4: #{tpu_custom_call.1} parent=1 // loop_header_branch
      %16 = sbr.rel (%p14) target = $region8
    $region5: #{tpu_custom_call.1} parent=1 // loop_body
      %s18 = ssub.s32 %s13, 1
      %s19 = ssub.s32 %s13, 2
      %s26 = sadd.s32 1, %s21
      %p27 = scmp.ge.s32.totalorder %s26, 1
      %s28 = scalar_select %p27, 0, %s26
      %s29 = sadd.s32 1, %s20
      %s30 = scalar_select %p27, %s29, %s20
      %p31 = scmp.ge.s32.totalorder %s30, 2
      %s32 = scalar_select %p31, 0, %s30
      %s33 = sadd.s32 %s20, %s21
      %s34 = sadd.s32 %s32, %s28
      %s35 = ssub.s32 %s33, %s34
      %p36 = scmp.eq.s32.totalorder %s35, 0
      %s38 = sadd.s32 %s37, 1
      %s39 = scalar_select %p36, %s37, %s38
      %p42 = pneg %p36
      %p43 = scmp.eq.s32.totalorder %s13, 1
      %p44 = por %p42, %p43
      %p45 = scmp.ne.s32.totalorder %s37, %s40
      %p46 = scmp.eq.s32.totalorder %s13, 0
      %p47 = por %p45, %p46
      %p48 = scmp.ne.s32.totalorder %s37, %s40
      %p49 = scmp.eq.s32.totalorder %s18, 1
      %p50 = por %p48, %p49
      %p51 = scmp.ne.s32.totalorder %s40, %s41
      %p52 = scmp.eq.s32.totalorder %s18, 0
      %p53 = por %p51, %p52
      %p54 = scmp.ne.s32.totalorder %s40, %s41
      %p55 = scmp.eq.s32.totalorder %s19, 1
      %p56 = por %p54, %p55
      %p58 = scmp.ne.s32.totalorder %s41, %s57
      %p59 = scmp.eq.s32.totalorder %s19, 0
      %p60 = por %p58, %p59
      %s62 = sadd.s32 %s61, 1
      %p65 = scmp.eq.s32.totalorder %s13, 1
      %p66 = scmp.ne.s32.totalorder %s61, %s63
      %p67 = scmp.eq.s32.totalorder %s13, 0
      %p68 = por %p66, %p67
      %p69 = scmp.ne.s32.totalorder %s61, %s63
      %p70 = scmp.eq.s32.totalorder %s18, 1
      %p71 = por %p69, %p70
      %p72 = scmp.ne.s32.totalorder %s63, %s64
      %p73 = scmp.eq.s32.totalorder %s18, 0
      %p74 = por %p72, %p73
      %p75 = scmp.ne.s32.totalorder %s63, %s64
      %p76 = scmp.eq.s32.totalorder %s19, 1
      %p77 = por %p75, %p76
      %p79 = scmp.ne.s32.totalorder %s64, %s78
      %p80 = scmp.eq.s32.totalorder %s19, 0
      %p81 = por %p79, %p80
      %s83 = sadd.s32 %s82, 1
      %p86 = scmp.eq.s32.totalorder %s13, 1
      %p87 = scmp.ne.s32.totalorder %s82, %s84
      %p88 = scmp.eq.s32.totalorder %s13, 0
      %p89 = por %p87, %p88
      %p90 = scmp.ne.s32.totalorder %s82, %s84
      %p91 = scmp.eq.s32.totalorder %s18, 1
      %p92 = por %p90, %p91
      %p93 = scmp.ne.s32.totalorder %s84, %s85
      %p94 = scmp.eq.s32.totalorder %s18, 0
      %p95 = por %p93, %p94
      %p96 = scmp.ne.s32.totalorder %s84, %s85
      %p97 = scmp.eq.s32.totalorder %s19, 1
      %p98 = por %p96, %p97
      %p100 = scmp.ne.s32.totalorder %s85, %s99
      %p101 = scmp.eq.s32.totalorder %s19, 0
      %p102 = por %p100, %p101
      %s104 = sadd.s32 %s103, 1
      %p107 = scmp.eq.s32.totalorder %s13, 1
      %p108 = scmp.ne.s32.totalorder %s103, %s105
      %p109 = scmp.eq.s32.totalorder %s13, 0
      %p110 = por %p108, %p109
      %p111 = scmp.ne.s32.totalorder %s103, %s105
      %p112 = scmp.eq.s32.totalorder %s18, 1
      %p113 = por %p111, %p112
      %p114 = scmp.ne.s32.totalorder %s105, %s106
      %p115 = scmp.eq.s32.totalorder %s18, 0
      %p116 = por %p114, %p115
      %p117 = scmp.ne.s32.totalorder %s105, %s106
      %p118 = scmp.eq.s32.totalorder %s19, 1
      %p119 = por %p117, %p118
      %p121 = scmp.ne.s32.totalorder %s106, %s120
      %p122 = scmp.eq.s32.totalorder %s19, 0
      %p123 = por %p121, %p122
      %s124 = ssub.s32 %s20, %s32
      %p125 = scmp.eq.s32.totalorder %s124, 0
      %s127 = sadd.s32 %s126, 1
      %s128 = scalar_select %p125, %s126, %s127
      %p131 = pneg %p125
      %p132 = scmp.eq.s32.totalorder %s13, 1
      %p133 = por %p131, %p132
      %p134 = scmp.ne.s32.totalorder %s126, %s129
      %p135 = scmp.eq.s32.totalorder %s13, 0
      %p136 = por %p134, %p135
      %p137 = scmp.ne.s32.totalorder %s126, %s129
      %p138 = scmp.eq.s32.totalorder %s18, 1
      %p139 = por %p137, %p138
      %p140 = scmp.ne.s32.totalorder %s129, %s130
      %p141 = scmp.eq.s32.totalorder %s18, 0
      %p142 = por %p140, %p141
      %p143 = scmp.ne.s32.totalorder %s129, %s130
      %p144 = scmp.eq.s32.totalorder %s19, 1
      %p145 = por %p143, %p144
      %p147 = scmp.ne.s32.totalorder %s130, %s146
      %p148 = scmp.eq.s32.totalorder %s19, 0
      %p149 = por %p147, %p148
      %p150 = scmp.le.s32.totalorder 1, %s13
      %p151 = scmp.lt.s32.totalorder %s13, 3
      %p152 = pnand %p150, %p151
      %p153 = pneg %p152
      // Predicated region
      $region9: #{tpu_custom_call.1} parent=5 // pred_check
        _
      $region10: #{tpu_custom_call.1} parent=5 // pred_check_branch
        %155 = sbr.rel (%p152) target = $region12
      $region11: #{tpu_custom_call.1} parent=5 // pred_region
        %s156 = ssub.s32 %s13, 1
        // Predicated region
        $region13: #{tpu_custom_call.1} parent=11 // pred_check
          %p157 = pneg %p74
        $region14: #{tpu_custom_call.1} parent=11 // pred_check_branch
          %159 = sbr.rel (%p157) target = $region16
        $region15: #{tpu_custom_call.1} parent=11 // pred_region
          _
        $region16: #{tpu_custom_call.1} parent=11 // pred_fallthru
          _
        // Predicated region
        $region17: #{tpu_custom_call.1} parent=11 // pred_check
          %p160 = pneg %p95
        $region18: #{tpu_custom_call.1} parent=11 // pred_check_branch
          %162 = sbr.rel (%p160) target = $region20
        $region19: #{tpu_custom_call.1} parent=11 // pred_region
          _
        $region20: #{tpu_custom_call.1} parent=11 // pred_fallthru
          _
        // Predicated region
        $region21: #{tpu_custom_call.1} parent=11 // pred_check
          %p163 = pneg %p116
        $region22: #{tpu_custom_call.1} parent=11 // pred_check_branch
          %165 = sbr.rel (%p163) target = $region24
        $region23: #{tpu_custom_call.1} parent=11 // pred_region
          _
        $region24: #{tpu_custom_call.1} parent=11 // pred_fallthru
          _
      $region12: #{tpu_custom_call.1} parent=5 // pred_fallthru
        _
      %p166 = scmp.lt.s32.totalorder %s13, 2
      // Predicated region
      $region25: #{tpu_custom_call.1} parent=5 // pred_check
        %p167 = pneg %p166
      $region26: #{tpu_custom_call.1} parent=5 // pred_check_branch
        %169 = sbr.rel (%p167) target = $region28
      $region27: #{tpu_custom_call.1} parent=5 // pred_region
        // Predicated region
        $region29: #{tpu_custom_call.1} parent=27 // pred_check
          %p170 = pneg %p47
        $region30: #{tpu_custom_call.1} parent=27 // pred_check_branch
          %172 = sbr.rel (%p170) target = $region32
        $region31: #{tpu_custom_call.1} parent=27 // pred_region
          %s173 = sadd.s32 %s20, %s21
          %p174 = scmp.lt.s32.totalorder %s173, 1
          %s175 = scalar_select %p174, %s173, 1
          %s176 = smul.addr %s175, 12
          %s177 = smul.addr %s176, 4
          %s178 = scalar_lea.vmem %s0, %s177
          %s179 = sadd.s32 %s20, %s21
        $region32: #{tpu_custom_call.1} parent=27 // pred_fallthru
          _
      $region28: #{tpu_custom_call.1} parent=5 // pred_fallthru
        _
      %p180 = scmp.le.s32.totalorder 1, %s13
      %p181 = scmp.lt.s32.totalorder %s13, 3
      %p182 = pnand %p180, %p181
      %p183 = pneg %p182
      // Predicated region
      $region33: #{tpu_custom_call.1} parent=5 // pred_check
        _
      $region34: #{tpu_custom_call.1} parent=5 // pred_check_branch
        %185 = sbr.rel (%p182) target = $region36
      $region35: #{tpu_custom_call.1} parent=5 // pred_region
        %s186 = ssub.s32 %s13, 1
        %s187 = sadd.s32 %s22, %s23
        %p188 = scmp.lt.s32.totalorder %s187, 1
        %s189 = scalar_select %p188, %s187, 1
        %s190 = smul.addr %s189, 12
        %s191 = smul.addr %s190, 4
        %s192 = scalar_lea.vmem %s0, %s191
        %p193 = pneg %p53
        %p194 = pneg %p50
        %p195 = pneg %p74
        %p196 = pneg %p71
        %p197 = pneg %p95
        %p198 = pneg %p92
        %p199 = pneg %p116
        %p200 = pneg %p113
        %p201 = pneg %p142
        %p202 = pneg %p139
        %s203 = sand.u32 %s129, 1
        %s204 = scalar_lea.sflag [#allocation5], %s203
        %s205 = sand.u32 %s129, 1
        %s206 = smul.addr %s205, 40
        %s207 = scalar_lea.vmem [#allocation4], %s206
        %s208 = sadd.s32 %s22, %s23
        %p209 = scmp.lt.s32.totalorder %s208, 1
        %s210 = scalar_select %p209, %s208, 1
        %s211 = smul.addr %s210, 12
        %s212 = smul.addr %s211, 4
        %s213 = scalar_lea.vmem %s0, %s212
        %s214 = sadd.s32 %s22, %s23
        %p216 = scmp.eq.s32.totalorder %s23, 0
        // Predicated region
        $region37: #{tpu_custom_call.1} parent=35 // pred_check
          %p217 = pneg %p216
        $region38: #{tpu_custom_call.1} parent=35 // pred_check_branch
          %219 = sbr.rel (%p217) target = $region40
        $region39: #{tpu_custom_call.1} parent=35 // pred_region
          %220 = vst [vmem:[#allocation2] sm:$0x1] 0.0
          %221 = vst [vmem:[#allocation3] sm:$0x1] 0.0
        $region40: #{tpu_custom_call.1} parent=35 // pred_fallthru
          _
        %v222 = vld [vmem:[%s213] sm:$0xf]
        %v223 = vld [vmem:[%s213 + $0x4] sm:$0xf]
        %v224 = vld [vmem:[%s213 + $0x8] sm:$0xf]
        %v225 = vld [vmem:[%s213 + $0xc] sm:$0xf]
        %v226 = vld [vmem:[%s213 + $0x10] sm:$0xf]
        %v227 = vld [vmem:[%s213 + $0x14] sm:$0xf]
        %v228 = vld [vmem:[%s213 + $0x18] sm:$0xf]
        %v229 = vld [vmem:[%s213 + $0x1c] sm:$0xf]
        %v230 = vld [vmem:[%s213 + $0x20] sm:$0xf]
        %v231 = vld [vmem:[%s213 + $0x24] sm:$0xf]
        %v232 = vld [vmem:[%s1] sm:$0xf]
        %v233 = vld [vmem:[%s1 + $0x4] sm:$0xf]
        %v234 = vld [vmem:[%s213 + $0x28] sm:$0x1]
        %s235 = scalar_lea.vmem %s1, 8
        %v236 = vld [vmem:[%s235] sm:$0xf]
        %v237 = vld [vmem:[%s235 + $0x4] sm:$0xf]
        %v249 = vunpack.c.l.b16 %v222
        %v250 = vunpack.c.l.b16 %v223
        %v251 = vunpack.c.l.b16 %v224
        %v252 = vunpack.c.l.b16 %v225
        %v253 = vunpack.c.l.b16 %v226
        %v254 = vunpack.c.l.b16 %v227
        %v255 = vunpack.c.l.b16 %v228
        %v256 = vunpack.c.l.b16 %v229
        %v257 = vunpack.c.l.b16 %v230
        %v258 = vunpack.c.l.b16 %v231
        %v259 = vunpack.c.l.b16 %v234
        %v260 = vpack.c.b16 %v250, %v249
        %v261 = vpack.c.b16 %v252, %v251
        %v262 = vpack.c.b16 %v254, %v253
        %v263 = vpack.c.b16 %v256, %v255
        %v264 = vpack.c.b16 %v258, %v257
        %v265 = vpack.c.b16 %v259, %v259
        %vm266 = vsmask.f32 7424
        %v268 = vshrl.u32 %v260, 16
        %v270 = vshll.u32 %v260, 16
        %v272 = vrot.slane %v270, 1
        %v273 = vor.u32 %v268, %v272
        %v275 = vshll.u32 %v261, 16
        %v277 = vrot.slane %v275, 1
        %v278 = vsel %vm266, %v273, %v277
        %v279 = vshrl.u32 %v261, 16
        %v281 = vor.u32 %v279, %v277
        %v283 = vshll.u32 %v262, 16
        %v285 = vrot.slane %v283, 1
        %v286 = vsel %vm266, %v281, %v285
        %v287 = vshrl.u32 %v262, 16
        %v289 = vor.u32 %v287, %v285
        %v291 = vshll.u32 %v263, 16
        %v293 = vrot.slane %v291, 1
        %v294 = vsel %vm266, %v289, %v293
        %v295 = vshrl.u32 %v263, 16
        %v297 = vor.u32 %v295, %v293
        %v299 = vshll.u32 %v264, 16
        %v301 = vrot.slane %v299, 1
        %v302 = vsel %vm266, %v297, %v301
        %v303 = vshrl.u32 %v264, 16
        %v305 = vor.u32 %v303, %v301
        %v307 = vshll.u32 %v265, 16
        %v309 = vrot.slane %v307, 1
        %v310 = vsel %vm266, %v305, %v309
        %v313 = vunpack.c.l.b16 %v236
        %v314 = vunpack.c.l.b16 %v237
        %v315 = vpack.c.b16 %v314, %v313
        %vm317 = vcmask 130048
        %v319 = vsel %vm317, %v278, 0
        %v322 = vsel %vm317, %v286, 0
        %v325 = vsel %vm317, %v294, 0
        %v328 = vsel %vm317, %v302, 0
        %v331 = vsel %vm317, %v310, 0
        %333 = vmatpush.bf16.msra.mxu0 0
        %334 = vmatpush.bf16.msra.mxu0 0
        %335 = vmatpush.bf16.msra.mxu0 0
        %336 = vmatpush.bf16.msra.mxu0 0
        %337 = vmatpush.bf16.msra.mxu0 0
        %338 = vmatpush.bf16.msra.mxu0 0
        %339 = vmatpush.bf16.msra.mxu0 0
        %340 = vmatpush.bf16.msra.mxu0 %v315
        %341 = vmatmul.bf16.gmra.mxu0 %v319
        %v342 = vpop.f32.mrf.mxu0
        %v343 = vadd.f32 0.0, %v342
        %v344 = vpop.f32.mrf.mxu0
        %v345 = vadd.f32 0.0, %v344
        %346 = vmatmul.bf16.gmra.mxu0 %v322
        %v347 = vpop.f32.mrf.mxu0
        %v348 = vadd.f32 0.0, %v347
        %v349 = vpop.f32.mrf.mxu0
        %v350 = vadd.f32 0.0, %v349
        %351 = vmatmul.bf16.gmra.mxu0 %v325
        %v352 = vpop.f32.mrf.mxu0
        %v353 = vadd.f32 0.0, %v352
        %v354 = vpop.f32.mrf.mxu0
        %v355 = vadd.f32 0.0, %v354
        %356 = vmatmul.bf16.gmra.mxu0 %v328
        %v357 = vpop.f32.mrf.mxu0
        %v358 = vadd.f32 0.0, %v357
        %v359 = vpop.f32.mrf.mxu0
        %v360 = vadd.f32 0.0, %v359
        %361 = vmatmul.bf16.gmra.mxu0 %v331
        %v362 = vpop.f32.mrf.mxu0
        %v363 = vadd.f32 0.0, %v362
        %v364 = vpop.f32.mrf.mxu0
        %v365 = vadd.f32 0.0, %v364
        %366 = vdwg.mxu0
        %v369 = vunpack.c.l.b16 %v232
        %v370 = vunpack.c.l.b16 %v233
        %v371 = vpack.c.b16 %v370, %v369
        %v373 = vsel %vm317, %v260, 0
        %v375 = vsel %vm317, %v261, 0
        %v377 = vsel %vm317, %v262, 0
        %v379 = vsel %vm317, %v263, 0
        %v381 = vsel %vm317, %v264, 0
        %383 = vmatpush.bf16.msra.mxu0 0
        %384 = vmatpush.bf16.msra.mxu0 0
        %385 = vmatpush.bf16.msra.mxu0 0
        %386 = vmatpush.bf16.msra.mxu0 0
        %387 = vmatpush.bf16.msra.mxu0 0
        %388 = vmatpush.bf16.msra.mxu0 0
        %389 = vmatpush.bf16.msra.mxu0 0
        %390 = vmatpush.bf16.msra.mxu0 %v371
        %391 = vmatmul.bf16.gmra.mxu0 %v373
        %v392 = vpop.f32.mrf.mxu0
        %v393 = vadd.f32 %v343, %v392
        %v394 = vpop.f32.mrf.mxu0
        %v395 = vadd.f32 %v345, %v394
        %396 = vmatmul.bf16.gmra.mxu0 %v375
        %v397 = vpop.f32.mrf.mxu0
        %v398 = vadd.f32 %v348, %v397
        %v399 = vpop.f32.mrf.mxu0
        %v400 = vadd.f32 %v350, %v399
        %401 = vmatmul.bf16.gmra.mxu0 %v377
        %v402 = vpop.f32.mrf.mxu0
        %v403 = vadd.f32 %v353, %v402
        %v404 = vpop.f32.mrf.mxu0
        %v405 = vadd.f32 %v355, %v404
        %406 = vmatmul.bf16.gmra.mxu0 %v379
        %v407 = vpop.f32.mrf.mxu0
        %v408 = vadd.f32 %v358, %v407
        %v409 = vpop.f32.mrf.mxu0
        %v410 = vadd.f32 %v360, %v409
        %411 = vmatmul.bf16.gmra.mxu0 %v381
        %v412 = vpop.f32.mrf.mxu0
        %v413 = vadd.f32 %v363, %v412
        %v414 = vpop.f32.mrf.mxu0
        %v415 = vadd.f32 %v365, %v414
        %416 = vdwg.mxu0
        %v417 = vld [vmem:[%s213 + $0x4] sm:$0xf]
        %v418 = vld [vmem:[%s213 + $0x8] sm:$0xf]
        %v419 = vld [vmem:[%s213 + $0xc] sm:$0xf]
        %v420 = vld [vmem:[%s213 + $0x10] sm:$0xf]
        %v421 = vld [vmem:[%s213 + $0x14] sm:$0xf]
        %v422 = vld [vmem:[%s213 + $0x18] sm:$0xf]
        %v423 = vld [vmem:[%s213 + $0x1c] sm:$0xf]
        %v424 = vld [vmem:[%s213 + $0x20] sm:$0xf]
        %v425 = vld [vmem:[%s213 + $0x24] sm:$0xf]
        %v426 = vld [vmem:[%s213 + $0x28] sm:$0xf]
        %v427 = vld [vmem:[%s213 + $0x2c] sm:$0x1]
        %s428 = scalar_lea.vmem %s1, 16
        %v429 = vld [vmem:[%s428] sm:$0xf]
        %v430 = vld [vmem:[%s428 + $0x4] sm:$0xf]
        %v442 = vunpack.c.l.b16 %v417
        %v443 = vunpack.c.l.b16 %v418
        %v444 = vunpack.c.l.b16 %v419
        %v445 = vunpack.c.l.b16 %v420
        %v446 = vunpack.c.l.b16 %v421
        %v447 = vunpack.c.l.b16 %v422
        %v448 = vunpack.c.l.b16 %v423
        %v449 = vunpack.c.l.b16 %v424
        %v450 = vunpack.c.l.b16 %v425
        %v451 = vunpack.c.l.b16 %v426
        %v452 = vunpack.c.l.b16 %v427
        %v453 = vpack.c.b16 %v443, %v442
        %v454 = vpack.c.b16 %v445, %v444
        %v455 = vpack.c.b16 %v447, %v446
        %v456 = vpack.c.b16 %v449, %v448
        %v457 = vpack.c.b16 %v451, %v450
        %v458 = vpack.c.b16 %v452, %v452
        %v460 = vshrl.u32 %v453, 16
        %v462 = vshll.u32 %v453, 16
        %v464 = vrot.slane %v462, 1
        %v465 = vor.u32 %v460, %v464
        %v467 = vshll.u32 %v454, 16
        %v469 = vrot.slane %v467, 1
        %v470 = vsel %vm266, %v465, %v469
        %v471 = vshrl.u32 %v454, 16
        %v473 = vor.u32 %v471, %v469
        %v475 = vshll.u32 %v455, 16
        %v477 = vrot.slane %v475, 1
        %v478 = vsel %vm266, %v473, %v477
        %v479 = vshrl.u32 %v455, 16
        %v481 = vor.u32 %v479, %v477
        %v483 = vshll.u32 %v456, 16
        %v485 = vrot.slane %v483, 1
        %v486 = vsel %vm266, %v481, %v485
        %v487 = vshrl.u32 %v456, 16
        %v489 = vor.u32 %v487, %v485
        %v491 = vshll.u32 %v457, 16
        %v493 = vrot.slane %v491, 1
        %v494 = vsel %vm266, %v489, %v493
        %v495 = vshrl.u32 %v457, 16
        %v497 = vor.u32 %v495, %v493
        %v499 = vshll.u32 %v458, 16
        %v501 = vrot.slane %v499, 1
        %v502 = vsel %vm266, %v497, %v501
        %v505 = vunpack.c.l.b16 %v429
        %v506 = vunpack.c.l.b16 %v430
        %v507 = vpack.c.b16 %v506, %v505
        %v510 = vsel %vm317, %v470, 0
        %v513 = vsel %vm317, %v478, 0
        %v516 = vsel %vm317, %v486, 0
        %v519 = vsel %vm317, %v494, 0
        %v522 = vsel %vm317, %v502, 0
        %524 = vmatpush.bf16.msra.mxu0 0
        %525 = vmatpush.bf16.msra.mxu0 0
        %526 = vmatpush.bf16.msra.mxu0 0
        %527 = vmatpush.bf16.msra.mxu0 0
        %528 = vmatpush.bf16.msra.mxu0 0
        %529 = vmatpush.bf16.msra.mxu0 0
        %530 = vmatpush.bf16.msra.mxu0 0
        %531 = vmatpush.bf16.msra.mxu0 %v507
        %532 = vmatmul.bf16.gmra.mxu0 %v510
        %v533 = vpop.f32.mrf.mxu0
        %v534 = vadd.f32 0.0, %v533
        %v535 = vpop.f32.mrf.mxu0
        %v536 = vadd.f32 0.0, %v535
        %537 = vmatmul.bf16.gmra.mxu0 %v513
        %v538 = vpop.f32.mrf.mxu0
        %v539 = vadd.f32 0.0, %v538
        %v540 = vpop.f32.mrf.mxu0
        %v541 = vadd.f32 0.0, %v540
        %542 = vmatmul.bf16.gmra.mxu0 %v516
        %v543 = vpop.f32.mrf.mxu0
        %v544 = vadd.f32 0.0, %v543
        %v545 = vpop.f32.mrf.mxu0
        %v546 = vadd.f32 0.0, %v545
        %547 = vmatmul.bf16.gmra.mxu0 %v519
        %v548 = vpop.f32.mrf.mxu0
        %v549 = vadd.f32 0.0, %v548
        %v550 = vpop.f32.mrf.mxu0
        %v551 = vadd.f32 0.0, %v550
        %552 = vmatmul.bf16.gmra.mxu0 %v522
        %v553 = vpop.f32.mrf.mxu0
        %v554 = vadd.f32 0.0, %v553
        %v555 = vpop.f32.mrf.mxu0
        %v556 = vadd.f32 0.0, %v555
        %557 = vdwg.mxu0
        %v558 = vadd.f32 %v393, %v534
        %v559 = vadd.f32 %v395, %v536
        %v560 = vadd.f32 %v398, %v539
        %v561 = vadd.f32 %v400, %v541
        %v562 = vadd.f32 %v403, %v544
        %v563 = vadd.f32 %v405, %v546
        %v564 = vadd.f32 %v408, %v549
        %v565 = vadd.f32 %v410, %v551
        %v566 = vadd.f32 %v413, %v554
        %v567 = vadd.f32 %v415, %v556
        %v568 = vld [vmem:[%s213 + $0x4] sm:$0xe]
        %s569 = scalar_lea.vmem %s1, 24
        %v570 = vld [vmem:[%s569] sm:$0xf]
        %v571 = vld [vmem:[%s569 + $0x4] sm:$0xf]
        %v573 = vunpack.c.l.b16 %v568
        %v574 = vpack.c.b16 %v443, %v573
        %vm575 = vcmask 1046528
        %v576 = vrot.slane %v574, 1
        %v577 = vrot.slane %v454, 1
        %v578 = vsel %vm575, %v576, %v577
        %v579 = vrot.slane %v455, 1
        %v580 = vsel %vm575, %v577, %v579
        %v581 = vrot.slane %v456, 1
        %v582 = vsel %vm575, %v579, %v581
        %v583 = vrot.slane %v457, 1
        %v584 = vsel %vm575, %v581, %v583
        %v585 = vrot.slane %v458, 1
        %v586 = vsel %vm575, %v583, %v585
        %v589 = vunpack.c.l.b16 %v570
        %v590 = vunpack.c.l.b16 %v571
        %v591 = vpack.c.b16 %v590, %v589
        %v594 = vsel %vm317, %v578, 0
        %v597 = vsel %vm317, %v580, 0
        %v600 = vsel %vm317, %v582, 0
        %v603 = vsel %vm317, %v584, 0
        %v606 = vsel %vm317, %v586, 0
        %608 = vmatpush.bf16.msra.mxu0 0
        %609 = vmatpush.bf16.msra.mxu0 0
        %610 = vmatpush.bf16.msra.mxu0 0
        %611 = vmatpush.bf16.msra.mxu0 0
        %612 = vmatpush.bf16.msra.mxu0 0
        %613 = vmatpush.bf16.msra.mxu0 0
        %614 = vmatpush.bf16.msra.mxu0 0
        %615 = vmatpush.bf16.msra.mxu0 %v591
        %616 = vmatmul.bf16.gmra.mxu0 %v594
        %v617 = vpop.f32.mrf.mxu0
        %v618 = vadd.f32 0.0, %v617
        %v619 = vpop.f32.mrf.mxu0
        %v620 = vadd.f32 0.0, %v619
        %621 = vmatmul.bf16.gmra.mxu0 %v597
        %v622 = vpop.f32.mrf.mxu0
        %v623 = vadd.f32 0.0, %v622
        %v624 = vpop.f32.mrf.mxu0
        %v625 = vadd.f32 0.0, %v624
        %626 = vmatmul.bf16.gmra.mxu0 %v600
        %v627 = vpop.f32.mrf.mxu0
        %v628 = vadd.f32 0.0, %v627
        %v629 = vpop.f32.mrf.mxu0
        %v630 = vadd.f32 0.0, %v629
        %631 = vmatmul.bf16.gmra.mxu0 %v603
        %v632 = vpop.f32.mrf.mxu0
        %v633 = vadd.f32 0.0, %v632
        %v634 = vpop.f32.mrf.mxu0
        %v635 = vadd.f32 0.0, %v634
        %636 = vmatmul.bf16.gmra.mxu0 %v606
        %v637 = vpop.f32.mrf.mxu0
        %v638 = vadd.f32 0.0, %v637
        %v639 = vpop.f32.mrf.mxu0
        %v640 = vadd.f32 0.0, %v639
        %641 = vdwg.mxu0
        %v642 = vadd.f32 %v558, %v618
        %v643 = vadd.f32 %v559, %v620
        %v644 = vadd.f32 %v560, %v623
        %v645 = vadd.f32 %v561, %v625
        %v646 = vadd.f32 %v562, %v628
        %v647 = vadd.f32 %v563, %v630
        %v648 = vadd.f32 %v564, %v633
        %v649 = vadd.f32 %v565, %v635
        %v650 = vadd.f32 %v566, %v638
        %v651 = vadd.f32 %v567, %v640
        %s652 = smul.u32 %s23, 80
        %v653 = vlaneseq
        %v654 = vshrl.u32 %v653, 7
        %v655 = vadd.s32 %v654, 8
        %v656 = vadd.s32 %v654, 16
        %v657 = vadd.s32 %v654, 24
        %v658 = vadd.s32 %v654, 32
        %v659 = vadd.s32 %v654, 40
        %v660 = vadd.s32 %v654, 48
        %v661 = vadd.s32 %v654, 56
        %v662 = vadd.s32 %v654, 64
        %v663 = vadd.s32 %v654, 72
        %v664 = vstv %s652
        %v665 = vadd.s32 %v664, %v654
        %v666 = vadd.s32 %v664, %v655
        %v667 = vadd.s32 %v664, %v656
        %v668 = vadd.s32 %v664, %v657
        %v669 = vadd.s32 %v664, %v658
        %v670 = vadd.s32 %v664, %v659
        %v671 = vadd.s32 %v664, %v660
        %v672 = vadd.s32 %v664, %v661
        %v673 = vadd.s32 %v664, %v662
        %v674 = vadd.s32 %v664, %v663
        %vm675 = vcmp.lt.s32.totalorder %v665, 0
        %v676 = vsub.s32 0, %v665
        %v677 = vsel %vm675, %v676, %v665
        %v678 = vand.u32 %v677, 65535
        %v679 = vshrl.u32 %v677, 16
        %v681 = vmul.u32 %v678, 14564
        %v682 = vmul.u32 %v678, 58254
        %v683 = vmul.u32 %v679, 14564
        %v684 = vmul.u32 %v679, 58254
        %v685 = vshll.u32 %v682, 16
        %v686 = vshrl.u32 %v682, 16
        %v687 = vshll.u32 %v683, 16
        %v688 = vshrl.u32 %v683, 16
        %vm689 = vc.u32 %v681, %v685
        %v690 = vsel %vm689, 1, 0
        %v691 = vadd.s32 %v681, %v685
        %v692 = vadd.s32 %v684, %v690
        %vm693 = vc.u32 %v691, %v687
        %v694 = vsel %vm693, 1, 0
        %v695 = vadd.s32 %v691, %v687
        %v696 = vadd.s32 %v692, %v694
        %v697 = vadd.s32 %v696, %v686
        %v698 = vadd.s32 %v697, %v688
        %v699 = vshrl.u32 %v698, 3
        %v700 = vmul.u32 %v699, 9
        %v701 = vsub.s32 %v677, %v700
        %v702 = vsub.s32 0, %v701
        %v703 = vsel %vm675, %v702, %v701
        %vm704 = vcmp.lt.s32.totalorder %v666, 0
        %v705 = vsub.s32 0, %v666
        %v706 = vsel %vm704, %v705, %v666
        %v707 = vand.u32 %v706, 65535
        %v708 = vshrl.u32 %v706, 16
        %v710 = vmul.u32 %v707, 14564
        %v711 = vmul.u32 %v707, 58254
        %v712 = vmul.u32 %v708, 14564
        %v713 = vmul.u32 %v708, 58254
        %v714 = vshll.u32 %v711, 16
        %v715 = vshrl.u32 %v711, 16
        %v716 = vshll.u32 %v712, 16
        %v717 = vshrl.u32 %v712, 16
        %vm718 = vc.u32 %v710, %v714
        %v719 = vsel %vm718, 1, 0
        %v720 = vadd.s32 %v710, %v714
        %v721 = vadd.s32 %v713, %v719
        %vm722 = vc.u32 %v720, %v716
        %v723 = vsel %vm722, 1, 0
        %v724 = vadd.s32 %v720, %v716
        %v725 = vadd.s32 %v721, %v723
        %v726 = vadd.s32 %v725, %v715
        %v727 = vadd.s32 %v726, %v717
        %v728 = vshrl.u32 %v727, 3
        %v729 = vmul.u32 %v728, 9
        %v730 = vsub.s32 %v706, %v729
        %v731 = vsub.s32 0, %v730
        %v732 = vsel %vm704, %v731, %v730
        %vm733 = vcmp.lt.s32.totalorder %v667, 0
        %v734 = vsub.s32 0, %v667
        %v735 = vsel %vm733, %v734, %v667
        %v736 = vand.u32 %v735, 65535
        %v737 = vshrl.u32 %v735, 16
        %v739 = vmul.u32 %v736, 14564
        %v740 = vmul.u32 %v736, 58254
        %v741 = vmul.u32 %v737, 14564
        %v742 = vmul.u32 %v737, 58254
        %v743 = vshll.u32 %v740, 16
        %v744 = vshrl.u32 %v740, 16
        %v745 = vshll.u32 %v741, 16
        %v746 = vshrl.u32 %v741, 16
        %vm747 = vc.u32 %v739, %v743
        %v748 = vsel %vm747, 1, 0
        %v749 = vadd.s32 %v739, %v743
        %v750 = vadd.s32 %v742, %v748
        %vm751 = vc.u32 %v749, %v745
        %v752 = vsel %vm751, 1, 0
        %v753 = vadd.s32 %v749, %v745
        %v754 = vadd.s32 %v750, %v752
        %v755 = vadd.s32 %v754, %v744
        %v756 = vadd.s32 %v755, %v746
        %v757 = vshrl.u32 %v756, 3
        %v758 = vmul.u32 %v757, 9
        %v759 = vsub.s32 %v735, %v758
        %v760 = vsub.s32 0, %v759
        %v761 = vsel %vm733, %v760, %v759
        %vm762 = vcmp.lt.s32.totalorder %v668, 0
        %v763 = vsub.s32 0, %v668
        %v764 = vsel %vm762, %v763, %v668
        %v765 = vand.u32 %v764, 65535
        %v766 = vshrl.u32 %v764, 16
        %v768 = vmul.u32 %v765, 14564
        %v769 = vmul.u32 %v765, 58254
        %v770 = vmul.u32 %v766, 14564
        %v771 = vmul.u32 %v766, 58254
        %v772 = vshll.u32 %v769, 16
        %v773 = vshrl.u32 %v769, 16
        %v774 = vshll.u32 %v770, 16
        %v775 = vshrl.u32 %v770, 16
        %vm776 = vc.u32 %v768, %v772
        %v777 = vsel %vm776, 1, 0
        %v778 = vadd.s32 %v768, %v772
        %v779 = vadd.s32 %v771, %v777
        %vm780 = vc.u32 %v778, %v774
        %v781 = vsel %vm780, 1, 0
        %v782 = vadd.s32 %v778, %v774
        %v783 = vadd.s32 %v779, %v781
        %v784 = vadd.s32 %v783, %v773
        %v785 = vadd.s32 %v784, %v775
        %v786 = vshrl.u32 %v785, 3
        %v787 = vmul.u32 %v786, 9
        %v788 = vsub.s32 %v764, %v787
        %v789 = vsub.s32 0, %v788
        %v790 = vsel %vm762, %v789, %v788
        %vm791 = vcmp.lt.s32.totalorder %v669, 0
        %v792 = vsub.s32 0, %v669
        %v793 = vsel %vm791, %v792, %v669
        %v794 = vand.u32 %v793, 65535
        %v795 = vshrl.u32 %v793, 16
        %v797 = vmul.u32 %v794, 14564
        %v798 = vmul.u32 %v794, 58254
        %v799 = vmul.u32 %v795, 14564
        %v800 = vmul.u32 %v795, 58254
        %v801 = vshll.u32 %v798, 16
        %v802 = vshrl.u32 %v798, 16
        %v803 = vshll.u32 %v799, 16
        %v804 = vshrl.u32 %v799, 16
        %vm805 = vc.u32 %v797, %v801
        %v806 = vsel %vm805, 1, 0
        %v807 = vadd.s32 %v797, %v801
        %v808 = vadd.s32 %v800, %v806
        %vm809 = vc.u32 %v807, %v803
        %v810 = vsel %vm809, 1, 0
        %v811 = vadd.s32 %v807, %v803
        %v812 = vadd.s32 %v808, %v810
        %v813 = vadd.s32 %v812, %v802
        %v814 = vadd.s32 %v813, %v804
        %v815 = vshrl.u32 %v814, 3
        %v816 = vmul.u32 %v815, 9
        %v817 = vsub.s32 %v793, %v816
        %v818 = vsub.s32 0, %v817
        %v819 = vsel %vm791, %v818, %v817
        %vm820 = vcmp.lt.s32.totalorder %v670, 0
        %v821 = vsub.s32 0, %v670
        %v822 = vsel %vm820, %v821, %v670
        %v823 = vand.u32 %v822, 65535
        %v824 = vshrl.u32 %v822, 16
        %v826 = vmul.u32 %v823, 14564
        %v827 = vmul.u32 %v823, 58254
        %v828 = vmul.u32 %v824, 14564
        %v829 = vmul.u32 %v824, 58254
        %v830 = vshll.u32 %v827, 16
        %v831 = vshrl.u32 %v827, 16
        %v832 = vshll.u32 %v828, 16
        %v833 = vshrl.u32 %v828, 16
        %vm834 = vc.u32 %v826, %v830
        %v835 = vsel %vm834, 1, 0
        %v836 = vadd.s32 %v826, %v830
        %v837 = vadd.s32 %v829, %v835
        %vm838 = vc.u32 %v836, %v832
        %v839 = vsel %vm838, 1, 0
        %v840 = vadd.s32 %v836, %v832
        %v841 = vadd.s32 %v837, %v839
        %v842 = vadd.s32 %v841, %v831
        %v843 = vadd.s32 %v842, %v833
        %v844 = vshrl.u32 %v843, 3
        %v845 = vmul.u32 %v844, 9
        %v846 = vsub.s32 %v822, %v845
        %v847 = vsub.s32 0, %v846
        %v848 = vsel %vm820, %v847, %v846
        %vm849 = vcmp.lt.s32.totalorder %v671, 0
        %v850 = vsub.s32 0, %v671
        %v851 = vsel %vm849, %v850, %v671
        %v852 = vand.u32 %v851, 65535
        %v853 = vshrl.u32 %v851, 16
        %v855 = vmul.u32 %v852, 14564
        %v856 = vmul.u32 %v852, 58254
        %v857 = vmul.u32 %v853, 14564
        %v858 = vmul.u32 %v853, 58254
        %v859 = vshll.u32 %v856, 16
        %v860 = vshrl.u32 %v856, 16
        %v861 = vshll.u32 %v857, 16
        %v862 = vshrl.u32 %v857, 16
        %vm863 = vc.u32 %v855, %v859
        %v864 = vsel %vm863, 1, 0
        %v865 = vadd.s32 %v855, %v859
        %v866 = vadd.s32 %v858, %v864
        %vm867 = vc.u32 %v865, %v861
        %v868 = vsel %vm867, 1, 0
        %v869 = vadd.s32 %v865, %v861
        %v870 = vadd.s32 %v866, %v868
        %v871 = vadd.s32 %v870, %v860
        %v872 = vadd.s32 %v871, %v862
        %v873 = vshrl.u32 %v872, 3
        %v874 = vmul.u32 %v873, 9
        %v875 = vsub.s32 %v851, %v874
        %v876 = vsub.s32 0, %v875
        %v877 = vsel %vm849, %v876, %v875
        %vm878 = vcmp.lt.s32.totalorder %v672, 0
        %v879 = vsub.s32 0, %v672
        %v880 = vsel %vm878, %v879, %v672
        %v881 = vand.u32 %v880, 65535
        %v882 = vshrl.u32 %v880, 16
        %v884 = vmul.u32 %v881, 14564
        %v885 = vmul.u32 %v881, 58254
        %v886 = vmul.u32 %v882, 14564
        %v887 = vmul.u32 %v882, 58254
        %v888 = vshll.u32 %v885, 16
        %v889 = vshrl.u32 %v885, 16
        %v890 = vshll.u32 %v886, 16
        %v891 = vshrl.u32 %v886, 16
        %vm892 = vc.u32 %v884, %v888
        %v893 = vsel %vm892, 1, 0
        %v894 = vadd.s32 %v884, %v888
        %v895 = vadd.s32 %v887, %v893
        %vm896 = vc.u32 %v894, %v890
        %v897 = vsel %vm896, 1, 0
        %v898 = vadd.s32 %v894, %v890
        %v899 = vadd.s32 %v895, %v897
        %v900 = vadd.s32 %v899, %v889
        %v901 = vadd.s32 %v900, %v891
        %v902 = vshrl.u32 %v901, 3
        %v903 = vmul.u32 %v902, 9
        %v904 = vsub.s32 %v880, %v903
        %v905 = vsub.s32 0, %v904
        %v906 = vsel %vm878, %v905, %v904
        %vm907 = vcmp.lt.s32.totalorder %v673, 0
        %v908 = vsub.s32 0, %v673
        %v909 = vsel %vm907, %v908, %v673
        %v910 = vand.u32 %v909, 65535
        %v911 = vshrl.u32 %v909, 16
        %v913 = vmul.u32 %v910, 14564
        %v914 = vmul.u32 %v910, 58254
        %v915 = vmul.u32 %v911, 14564
        %v916 = vmul.u32 %v911, 58254
        %v917 = vshll.u32 %v914, 16
        %v918 = vshrl.u32 %v914, 16
        %v919 = vshll.u32 %v915, 16
        %v920 = vshrl.u32 %v915, 16
        %vm921 = vc.u32 %v913, %v917
        %v922 = vsel %vm921, 1, 0
        %v923 = vadd.s32 %v913, %v917
        %v924 = vadd.s32 %v916, %v922
        %vm925 = vc.u32 %v923, %v919
        %v926 = vsel %vm925, 1, 0
        %v927 = vadd.s32 %v923, %v919
        %v928 = vadd.s32 %v924, %v926
        %v929 = vadd.s32 %v928, %v918
        %v930 = vadd.s32 %v929, %v920
        %v931 = vshrl.u32 %v930, 3
        %v932 = vmul.u32 %v931, 9
        %v933 = vsub.s32 %v909, %v932
        %v934 = vsub.s32 0, %v933
        %v935 = vsel %vm907, %v934, %v933
        %vm936 = vcmp.lt.s32.totalorder %v674, 0
        %v937 = vsub.s32 0, %v674
        %v938 = vsel %vm936, %v937, %v674
        %v939 = vand.u32 %v938, 65535
        %v940 = vshrl.u32 %v938, 16
        %v942 = vmul.u32 %v939, 14564
        %v943 = vmul.u32 %v939, 58254
        %v944 = vmul.u32 %v940, 14564
        %v945 = vmul.u32 %v940, 58254
        %v946 = vshll.u32 %v943, 16
        %v947 = vshrl.u32 %v943, 16
        %v948 = vshll.u32 %v944, 16
        %v949 = vshrl.u32 %v944, 16
        %vm950 = vc.u32 %v942, %v946
        %v951 = vsel %vm950, 1, 0
        %v952 = vadd.s32 %v942, %v946
        %v953 = vadd.s32 %v945, %v951
        %vm954 = vc.u32 %v952, %v948
        %v955 = vsel %vm954, 1, 0
        %v956 = vadd.s32 %v952, %v948
        %v957 = vadd.s32 %v953, %v955
        %v958 = vadd.s32 %v957, %v947
        %v959 = vadd.s32 %v958, %v949
        %v960 = vshrl.u32 %v959, 3
        %v961 = vmul.u32 %v960, 9
        %v962 = vsub.s32 %v938, %v961
        %v963 = vsub.s32 0, %v962
        %v964 = vsel %vm936, %v963, %v962
        %vm965 = vcmp.ne.s32.totalorder %v703, 0
        %vm966 = vcmp.ne.s32.totalorder %v732, 0
        %vm967 = vcmp.ne.s32.totalorder %v761, 0
        %vm968 = vcmp.ne.s32.totalorder %v790, 0
        %vm969 = vcmp.ne.s32.totalorder %v819, 0
        %vm970 = vcmp.ne.s32.totalorder %v848, 0
        %vm971 = vcmp.ne.s32.totalorder %v877, 0
        %vm972 = vcmp.ne.s32.totalorder %v906, 0
        %vm973 = vcmp.ne.s32.totalorder %v935, 0
        %vm974 = vcmp.ne.s32.totalorder %v964, 0
        %vm975 = vcmp.lt.s32.totalorder %v703, 0
        %vm976 = vcmp.lt.s32.totalorder %v732, 0
        %vm977 = vcmp.lt.s32.totalorder %v761, 0
        %vm978 = vcmp.lt.s32.totalorder %v790, 0
        %vm979 = vcmp.lt.s32.totalorder %v819, 0
        %vm980 = vcmp.lt.s32.totalorder %v848, 0
        %vm981 = vcmp.lt.s32.totalorder %v877, 0
        %vm982 = vcmp.lt.s32.totalorder %v906, 0
        %vm983 = vcmp.lt.s32.totalorder %v935, 0
        %vm984 = vcmp.lt.s32.totalorder %v964, 0
        %vm985 = vmand %vm975, %vm965
        %vm986 = vmand %vm976, %vm966
        %vm987 = vmand %vm977, %vm967
        %vm988 = vmand %vm978, %vm968
        %vm989 = vmand %vm979, %vm969
        %vm990 = vmand %vm980, %vm970
        %vm991 = vmand %vm981, %vm971
        %vm992 = vmand %vm982, %vm972
        %vm993 = vmand %vm983, %vm973
        %vm994 = vmand %vm984, %vm974
        %v995 = vadd.s32 %v703, 9
        %v996 = vadd.s32 %v732, 9
        %v997 = vadd.s32 %v761, 9
        %v998 = vadd.s32 %v790, 9
        %v999 = vadd.s32 %v819, 9
        %v1000 = vadd.s32 %v848, 9
        %v1001 = vadd.s32 %v877, 9
        %v1002 = vadd.s32 %v906, 9
        %v1003 = vadd.s32 %v935, 9
        %v1004 = vadd.s32 %v964, 9
        %v1005 = vsel %vm985, %v995, %v703
        %v1006 = vsel %vm986, %v996, %v732
        %v1007 = vsel %vm987, %v997, %v761
        %v1008 = vsel %vm988, %v998, %v790
        %v1009 = vsel %vm989, %v999, %v819
        %v1010 = vsel %vm990, %v1000, %v848
        %v1011 = vsel %vm991, %v1001, %v877
        %v1012 = vsel %vm992, %v1002, %v906
        %v1013 = vsel %vm993, %v1003, %v935
        %v1014 = vsel %vm994, %v1004, %v964
        %vm1015 = vcmp.lt.s32.totalorder %v1005, 8
        %vm1016 = vcmp.lt.s32.totalorder %v1006, 8
        %vm1017 = vcmp.lt.s32.totalorder %v1007, 8
        %vm1018 = vcmp.lt.s32.totalorder %v1008, 8
        %vm1019 = vcmp.lt.s32.totalorder %v1009, 8
        %vm1020 = vcmp.lt.s32.totalorder %v1010, 8
        %vm1021 = vcmp.lt.s32.totalorder %v1011, 8
        %vm1022 = vcmp.lt.s32.totalorder %v1012, 8
        %vm1023 = vcmp.lt.s32.totalorder %v1013, 8
        %vm1024 = vcmp.lt.s32.totalorder %v1014, 8
        %vm1025 = vcmp.lt.s32.totalorder %v665, 72
        %vm1026 = vcmp.lt.s32.totalorder %v666, 72
        %vm1027 = vcmp.lt.s32.totalorder %v667, 72
        %vm1028 = vcmp.lt.s32.totalorder %v668, 72
        %vm1029 = vcmp.lt.s32.totalorder %v669, 72
        %vm1030 = vcmp.lt.s32.totalorder %v670, 72
        %vm1031 = vcmp.lt.s32.totalorder %v671, 72
        %vm1032 = vcmp.lt.s32.totalorder %v672, 72
        %vm1033 = vcmp.lt.s32.totalorder %v673, 72
        %vm1034 = vcmp.lt.s32.totalorder %v674, 72
        %vm1035 = vmand %vm1015, %vm1025
        %vm1036 = vmand %vm1016, %vm1026
        %vm1037 = vmand %vm1017, %vm1027
        %vm1038 = vmand %vm1018, %vm1028
        %vm1039 = vmand %vm1019, %vm1029
        %vm1040 = vmand %vm1020, %vm1030
        %vm1041 = vmand %vm1021, %vm1031
        %vm1042 = vmand %vm1022, %vm1032
        %vm1043 = vmand %vm1023, %vm1033
        %vm1044 = vmand %vm1024, %vm1034
        %v1045 = vsel %vm1035, 1, 0
        %v1046 = vsel %vm1036, 1, 0
        %v1047 = vsel %vm1037, 1, 0
        %v1048 = vsel %vm1038, 1, 0
        %v1049 = vsel %vm1039, 1, 0
        %v1050 = vsel %vm1040, 1, 0
        %v1051 = vsel %vm1041, 1, 0
        %v1052 = vsel %vm1042, 1, 0
        %v1053 = vsel %vm1043, 1, 0
        %v1054 = vsel %vm1044, 1, 0
        %v1055 = vcvt.s32.f32 %v1045
        %v1056 = vcvt.s32.f32 %v1046
        %v1057 = vcvt.s32.f32 %v1047
        %v1058 = vcvt.s32.f32 %v1048
        %v1059 = vcvt.s32.f32 %v1049
        %v1060 = vcvt.s32.f32 %v1050
        %v1061 = vcvt.s32.f32 %v1051
        %v1062 = vcvt.s32.f32 %v1052
        %v1063 = vcvt.s32.f32 %v1053
        %v1064 = vcvt.s32.f32 %v1054
        %v1065 = vmul.f32 %v642, %v1055
        %v1066 = vmul.f32 %v643, %v1056
        %v1067 = vmul.f32 %v644, %v1057
        %v1068 = vmul.f32 %v645, %v1058
        %v1069 = vmul.f32 %v646, %v1059
        %v1070 = vmul.f32 %v647, %v1060
        %v1071 = vmul.f32 %v648, %v1061
        %v1072 = vmul.f32 %v649, %v1062
        %v1073 = vmul.f32 %v650, %v1063
        %v1074 = vmul.f32 %v651, %v1064
        %v1075 = vld [vmem:[#allocation2] sm:$0x1]
        %v1076 = vadd.f32 %v1065, %v1066
        %v1077 = vadd.f32 %v1076, %v1067
        %v1078 = vadd.f32 %v1077, %v1068
        %v1079 = vadd.f32 %v1078, %v1069
        %v1080 = vadd.f32 %v1079, %v1070
        %v1081 = vadd.f32 %v1080, %v1071
        %v1082 = vadd.f32 %v1081, %v1072
        %v1083 = vadd.f32 %v1082, %v1073
        %v1084 = vadd.f32 %v1083, %v1074
        %v1085 = vrot.slane %v1084, 4
        %v1086 = vadd.f32 %v1084, %v1085
        %v1087 = vrot.slane %v1086, 2
        %v1088 = vadd.f32 %v1086, %v1087
        %v1089 = vrot.slane %v1088, 1
        %v1090 = vadd.f32 %v1088, %v1089
        %v1091 = vadd.f32 %v1075, %v1090
        %1092 = vst [vmem:[#allocation2] sm:$0x1] %v1091
        %v1093 = vld [vmem:[#allocation3] sm:$0x1]
        %v1094 = vmul.f32 %v1065, %v1065
        %v1095 = vmul.f32 %v1066, %v1066
        %v1096 = vmul.f32 %v1067, %v1067
        %v1097 = vmul.f32 %v1068, %v1068
        %v1098 = vmul.f32 %v1069, %v1069
        %v1099 = vmul.f32 %v1070, %v1070
        %v1100 = vmul.f32 %v1071, %v1071
        %v1101 = vmul.f32 %v1072, %v1072
        %v1102 = vmul.f32 %v1073, %v1073
        %v1103 = vmul.f32 %v1074, %v1074
        %v1104 = vadd.f32 %v1094, %v1095
        %v1105 = vadd.f32 %v1104, %v1096
        %v1106 = vadd.f32 %v1105, %v1097
        %v1107 = vadd.f32 %v1106, %v1098
        %v1108 = vadd.f32 %v1107, %v1099
        %v1109 = vadd.f32 %v1108, %v1100
        %v1110 = vadd.f32 %v1109, %v1101
        %v1111 = vadd.f32 %v1110, %v1102
        %v1112 = vadd.f32 %v1111, %v1103
        %v1113 = vrot.slane %v1112, 4
        %v1114 = vadd.f32 %v1112, %v1113
        %v1115 = vrot.slane %v1114, 2
        %v1116 = vadd.f32 %v1114, %v1115
        %v1117 = vrot.slane %v1116, 1
        %v1118 = vadd.f32 %v1116, %v1117
        %v1119 = vadd.f32 %v1093, %v1118
        %1120 = vst [vmem:[#allocation3] sm:$0x1] %v1119
        %v1121 = vpack.c.bf16 %v642, %v642
        %v1122 = vpack.c.bf16 %v643, %v643
        %v1123 = vpack.c.bf16 %v644, %v644
        %v1124 = vpack.c.bf16 %v645, %v645
        %v1125 = vpack.c.bf16 %v646, %v646
        %v1126 = vpack.c.bf16 %v647, %v647
        %v1127 = vpack.c.bf16 %v648, %v648
        %v1128 = vpack.c.bf16 %v649, %v649
        %v1129 = vpack.c.bf16 %v650, %v650
        %v1130 = vpack.c.bf16 %v651, %v651
        %s1131 = sshra.s32 %s652, 3
        %s1132 = sand.u32 %s652, 7
        %s1133 = smul.addr %s1131, 4
        %s1134 = scalar_lea.vmem %s207, %s1133 [#allocation4]
        %1135 = vst [vmem:[%s1134] sm:$0xf] %v1121
        %1136 = vst [vmem:[%s1134 + $0x4] sm:$0xf] %v1122
        %1137 = vst [vmem:[%s1134 + $0x8] sm:$0xf] %v1123
        %1138 = vst [vmem:[%s1134 + $0xc] sm:$0xf] %v1124
        %1139 = vst [vmem:[%s1134 + $0x10] sm:$0xf] %v1125
        %1140 = vst [vmem:[%s1134 + $0x14] sm:$0xf] %v1126
        %1141 = vst [vmem:[%s1134 + $0x18] sm:$0xf] %v1127
        %1142 = vst [vmem:[%s1134 + $0x1c] sm:$0xf] %v1128
        %1143 = vst [vmem:[%s1134 + $0x20] sm:$0xf] %v1129
        %1144 = vst [vmem:[%s1134 + $0x24] sm:$0xf] %v1130
        // Predicated region
        $region41: #{tpu_custom_call.1} parent=35 // pred_check
          %p1145 = pneg %p216
        $region42: #{tpu_custom_call.1} parent=35 // pred_check_branch
          %1147 = sbr.rel (%p1145) target = $region44
        $region43: #{tpu_custom_call.1} parent=35 // pred_region
          %v1148 = vld [vmem:[#allocation2] sm:$0x1]
          %v1149 = vmul.f32 %v1148, 0.015625
          %v1150 = vld [vmem:[#allocation3] sm:$0x1]
          %v1151 = vmul.f32 %v1150, 0.015625
          %v1152 = vmul.f32 %v1149, %v1149
          %v1153 = vsub.f32 %v1151, %v1152
          %v1154 = vmax.f32 %v1153, 0.0
          %v1155 = vld [vmem:[%s2] sm:$0x1]
          %v1156 = vadd.f32 %v1154, 1e-05
          %v1157 = vrsqrt.pop %v1156
          %v1158 = vmul.f32 %v1157, %v1156
          %v1159 = vmul.f32 %v1158, %v1157
          %v1160 = vmul.f32 0.5, %v1159
          %v1161 = vsub.f32 1.5, %v1160
          %v1162 = vmul.f32 %v1157, %v1161
          %vm1163 = vweird.f32 %v1156
          %vm1164 = vweird.f32 %v1157
          %vm1165 = vmor %vm1163, %vm1164
          %v1166 = vsel %vm1165, %v1157, %v1162
          %v1167 = vmul.f32 %v1155, %v1166
          %v1168 = vld [vmem:[%s3] sm:$0x1]
          %v1169 = vmul.f32 %v1149, %v1167
          %v1170 = vsub.f32 %v1168, %v1169
          %v1171 = vld [vmem:[%s207] sm:$0xf]
          %v1172 = vld [vmem:[%s207 + $0x4] sm:$0xf]
          %v1173 = vld [vmem:[%s207 + $0x8] sm:$0xf]
          %v1174 = vld [vmem:[%s207 + $0xc] sm:$0xf]
          %v1175 = vld [vmem:[%s207 + $0x10] sm:$0xf]
          %v1176 = vld [vmem:[%s207 + $0x14] sm:$0xf]
          %v1177 = vld [vmem:[%s207 + $0x18] sm:$0xf]
          %v1178 = vld [vmem:[%s207 + $0x1c] sm:$0xf]
          %v1179 = vld [vmem:[%s207 + $0x20] sm:$0xf]
          %v1180 = vld [vmem:[%s207 + $0x24] sm:$0xf]
          %v1181 = vunpack.c.l.bf16 %v1171
          %v1182 = vunpack.c.l.bf16 %v1172
          %v1183 = vunpack.c.l.bf16 %v1173
          %v1184 = vunpack.c.l.bf16 %v1174
          %v1185 = vunpack.c.l.bf16 %v1175
          %v1186 = vunpack.c.l.bf16 %v1176
          %v1187 = vunpack.c.l.bf16 %v1177
          %v1188 = vunpack.c.l.bf16 %v1178
          %v1189 = vunpack.c.l.bf16 %v1179
          %v1190 = vunpack.c.l.bf16 %v1180
          %v1192 = vperm.slane %v1167, 0
          %v1194 = vmul.f32 %v1181, %v1192
          %v1195 = vmul.f32 %v1182, %v1192
          %v1196 = vmul.f32 %v1183, %v1192
          %v1197 = vmul.f32 %v1184, %v1192
          %v1198 = vmul.f32 %v1185, %v1192
          %v1199 = vmul.f32 %v1186, %v1192
          %v1200 = vmul.f32 %v1187, %v1192
          %v1201 = vmul.f32 %v1188, %v1192
          %v1202 = vmul.f32 %v1189, %v1192
          %v1203 = vmul.f32 %v1190, %v1192
          %v1205 = vperm.slane %v1170, 0
          %v1207 = vadd.f32 %v1194, %v1205
          %v1208 = vadd.f32 %v1195, %v1205
          %v1209 = vadd.f32 %v1196, %v1205
          %v1210 = vadd.f32 %v1197, %v1205
          %v1211 = vadd.f32 %v1198, %v1205
          %v1212 = vadd.f32 %v1199, %v1205
          %v1213 = vadd.f32 %v1200, %v1205
          %v1214 = vadd.f32 %v1201, %v1205
          %v1215 = vadd.f32 %v1202, %v1205
          %v1216 = vadd.f32 %v1203, %v1205
          %vm1217 = vcmp.gt.f32.partialorder %v1207, 0.0
          %vm1218 = vcmp.gt.f32.partialorder %v1208, 0.0
          %vm1219 = vcmp.gt.f32.partialorder %v1209, 0.0
          %vm1220 = vcmp.gt.f32.partialorder %v1210, 0.0
          %vm1221 = vcmp.gt.f32.partialorder %v1211, 0.0
          %vm1222 = vcmp.gt.f32.partialorder %v1212, 0.0
          %vm1223 = vcmp.gt.f32.partialorder %v1213, 0.0
          %vm1224 = vcmp.gt.f32.partialorder %v1214, 0.0
          %vm1225 = vcmp.gt.f32.partialorder %v1215, 0.0
          %vm1226 = vcmp.gt.f32.partialorder %v1216, 0.0
          %v1227 = vmul.f32 %v1207, 0.2
          %v1228 = vmul.f32 %v1208, 0.2
          %v1229 = vmul.f32 %v1209, 0.2
          %v1230 = vmul.f32 %v1210, 0.2
          %v1231 = vmul.f32 %v1211, 0.2
          %v1232 = vmul.f32 %v1212, 0.2
          %v1233 = vmul.f32 %v1213, 0.2
          %v1234 = vmul.f32 %v1214, 0.2
          %v1235 = vmul.f32 %v1215, 0.2
          %v1236 = vmul.f32 %v1216, 0.2
          %v1237 = vsel %vm1217, %v1207, %v1227
          %v1238 = vsel %vm1218, %v1208, %v1228
          %v1239 = vsel %vm1219, %v1209, %v1229
          %v1240 = vsel %vm1220, %v1210, %v1230
          %v1241 = vsel %vm1221, %v1211, %v1231
          %v1242 = vsel %vm1222, %v1212, %v1232
          %v1243 = vsel %vm1223, %v1213, %v1233
          %v1244 = vsel %vm1224, %v1214, %v1234
          %v1245 = vsel %vm1225, %v1215, %v1235
          %v1246 = vsel %vm1226, %v1216, %v1236
          %v1247 = vpack.c.bf16 %v1237, %v1237
          %v1248 = vpack.c.bf16 %v1238, %v1238
          %v1249 = vpack.c.bf16 %v1239, %v1239
          %v1250 = vpack.c.bf16 %v1240, %v1240
          %v1251 = vpack.c.bf16 %v1241, %v1241
          %v1252 = vpack.c.bf16 %v1242, %v1242
          %v1253 = vpack.c.bf16 %v1243, %v1243
          %v1254 = vpack.c.bf16 %v1244, %v1244
          %v1255 = vpack.c.bf16 %v1245, %v1245
          %v1256 = vpack.c.bf16 %v1246, %v1246
          %1257 = vst [vmem:[%s207] sm:$0xf] %v1247
          %1258 = vst [vmem:[%s207 + $0x4] sm:$0xf] %v1248
          %1259 = vst [vmem:[%s207 + $0x8] sm:$0xf] %v1249
          %1260 = vst [vmem:[%s207 + $0xc] sm:$0xf] %v1250
          %1261 = vst [vmem:[%s207 + $0x10] sm:$0xf] %v1251
          %1262 = vst [vmem:[%s207 + $0x14] sm:$0xf] %v1252
          %1263 = vst [vmem:[%s207 + $0x18] sm:$0xf] %v1253
          %1264 = vst [vmem:[%s207 + $0x1c] sm:$0xf] %v1254
          %1265 = vst [vmem:[%s207 + $0x20] sm:$0xf] %v1255
          %1266 = vst [vmem:[%s207 + $0x24] sm:$0xf] %v1256
        $region44: #{tpu_custom_call.1} parent=35 // pred_fallthru
          _
        %s1267 = sand.u32 %s129, 1
        %s1268 = scalar_lea.sflag [#allocation5], %s1267
        %s1269 = sand.u32 %s129, 1
        %s1270 = smul.addr %s1269, 40
        %s1271 = scalar_lea.vmem [#allocation4], %s1270
        // Predicated region
        $region45: #{tpu_custom_call.1} parent=35 // pred_check
          %p1272 = pneg %p139
        $region46: #{tpu_custom_call.1} parent=35 // pred_check_branch
          %1274 = sbr.rel (%p1272) target = $region48
        $region47: #{tpu_custom_call.1} parent=35 // pred_region
          %1276 = vsyncadd %s1268, 0
          %s1277 = smul.addr %s22, 10
          %s1278 = smul.addr %s1277, 4
          %s1279 = scalar_lea.hbm %s4, %s1278
          %s1280 = sshll.u32 %s1271, 4
          %s1281 = int_to_ptr.vmem [resolvable:$true] %s1280
          %s1282 = sshll.u32 %s1279, 4
          %s1283 = int_to_ptr.hbm [resolvable:$true] %s1282
          %1288 = dma.vmem_to_hbm [thread:$0]  %s1281, 640, %s1283, %s1268, 64, 64, 4
        $region48: #{tpu_custom_call.1} parent=35 // pred_fallthru
          _
      $region36: #{tpu_custom_call.1} parent=5 // pred_fallthru
        _
      %p1289 = scmp.le.s32.totalorder 2, %s13
      // Predicated region
      $region49: #{tpu_custom_call.1} parent=5 // pred_check
        %p1290 = pneg %p1289
      $region50: #{tpu_custom_call.1} parent=5 // pred_check_branch
        %1292 = sbr.rel (%p1290) target = $region52
      $region51: #{tpu_custom_call.1} parent=5 // pred_region
        %s1293 = ssub.s32 %s13, 2
        // Predicated region
        $region53: #{tpu_custom_call.1} parent=51 // pred_check
          %p1294 = pneg %p145
        $region54: #{tpu_custom_call.1} parent=51 // pred_check_branch
          %1296 = sbr.rel (%p1294) target = $region56
        $region55: #{tpu_custom_call.1} parent=51 // pred_region
          %s1297 = sand.u32 %s130, 1
          %s1298 = scalar_lea.sflag [#allocation5], %s1297
          %s1299 = sand.u32 %s130, 1
          %s1300 = smul.addr %s1299, 40
          %s1301 = scalar_lea.vmem [#allocation4], %s1300
          %1303 = dma.done %s1298, 640
        $region56: #{tpu_custom_call.1} parent=51 // pred_fallthru
          _
      $region52: #{tpu_custom_call.1} parent=5 // pred_fallthru
        _
    $region6: #{tpu_custom_call.1} parent=1 // loop_footer
      %s17 = sadd.s32 1, %s13
    $region7: #{tpu_custom_call.1} parent=1 // loop_footer_branch
      %12 = sbr.rel target = $region3
    $region8: #{tpu_custom_call.1} parent=1 // loop_exit
      _
    %1304 = vsyncpa [#allocation5], 1
    %s1305 = scalar_lea.sflag [#allocation5], 1
    %1306 = vsyncpa %s1305, 1

</llo_original>
